<compile_context>
chip_gen: v7x
topology: tpu7x:2x2x1
jax: 0.10.0
libtpu: 0.0.40
codegen_flags: <defaults>
</compile_context>

<pallas_src>
import math

import numpy as np
import jax
import jax.numpy as jnp
from jax import lax
from jax.experimental import pallas as pl
from jax.experimental.pallas import tpu as pltpu


# ----------------------------------------------------------------------------
# Kernels
# ----------------------------------------------------------------------------

def _anchor_kernel(x_ref, m_ref, wp_ref, bp_ref, a_ref, anchor_ref):
    """Pass 1: accumulate anchor^T = A @ (mask * (Wp x + bp))^T over hw.

    x_ref     : (C, T)    input tile (channels on sublanes, pixels on lanes)
    m_ref     : (1, T)    per-pixel foreground probability tile
    wp_ref    : (S, C)    conv_proj weight
    bp_ref    : (S, 1)    conv_proj bias
    a_ref     : (Nn, hw)  VMEM-resident adaptive-avg-pool matrix (full)
    anchor_ref: (Nn, S)   accumulator (revisited across the hw grid axis)
    """
    t = pl.program_id(1)

    @pl.when(t == 0)
    def _():
        anchor_ref[...] = jnp.zeros_like(anchor_ref)

    tile = x_ref.shape[-1]
    x = x_ref[...].astype(jnp.bfloat16)                               # (C, T)
    mask = m_ref[...].astype(jnp.float32)                             # (1, T)

    xp = jnp.dot(wp_ref[...].astype(jnp.bfloat16), x,
                 preferred_element_type=jnp.float32) + bp_ref[...]    # (S, T)
    xm = (xp * mask).astype(jnp.bfloat16)                             # (S, T)

    start = t * tile
    if tile % 128 == 0:
        start = pl.multiple_of(start, 128)
    a_blk = a_ref[:, pl.ds(start, tile)].astype(jnp.bfloat16)         # (Nn, T)

    # A_blk @ xm^T  (contract the lane dim of both operands)
    anchor_ref[...] += lax.dot_general(
        a_blk, xm, (((1,), (1,)), ((), ())),
        preferred_element_type=jnp.float32)                           # (Nn, S)


def _node_state_kernel(x_ref, wsp_ref, bsp_ref, anchor_t_ref, nstate_ref):
    """Pass 2: accumulate x_n_state = x_state @ softmax_nodes(anchor^T xp)^T.

    x_ref       : (C, T)
    wsp_ref     : (2S, C)  stacked [conv_state; conv_proj] weight
    bsp_ref     : (2S, 1)  stacked bias
    anchor_t_ref: (Nn, S)  transposed anchor (from pass 1)
    nstate_ref  : (S, Nn)  accumulator (revisited across the hw grid axis)
    """
    @pl.when(pl.program_id(1) == 0)
    def _():
        nstate_ref[...] = jnp.zeros_like(nstate_ref)

    s = wsp_ref.shape[0] // 2
    x = x_ref[...].astype(jnp.bfloat16)                               # (C, T)

    # single stacked matmul, then slice state / proj halves
    xsp = jnp.dot(wsp_ref[...].astype(jnp.bfloat16), x,
                  preferred_element_type=jnp.float32) + bsp_ref[...]  # (2S, T)
    xs = xsp[:s]
    xp = xsp[s:]

    logits = jnp.dot(anchor_t_ref[...].astype(jnp.bfloat16),
                     xp.astype(jnp.bfloat16),
                     preferred_element_type=jnp.float32)              # (Nn, T)
    lmax = jnp.max(logits, axis=0, keepdims=True)
    p = jnp.exp(logits - lmax)
    z = p * pl.reciprocal(jnp.sum(p, axis=0, keepdims=True), approx=True)

    # xs @ z^T
    nstate_ref[...] += lax.dot_general(
        xs.astype(jnp.bfloat16), z.astype(jnp.bfloat16),
        (((1,), (1,)), ((), ())),
        preferred_element_type=jnp.float32)                           # (S, Nn)


def _output_kernel(x_ref, wp_ref, bp_ref, anchor_t_ref, mproj_ref, o_ref):
    """Pass 3: out_tile = x + M @ z, with M = W_ext @ GCN(xn) pre-folded on host.

    The per-pixel node softmax z is recomputed from x (cheaper than writing and
    re-reading the (Nn, hw) attention map through HBM).
    """
    x = x_ref[...].astype(jnp.float32)                                # (C, T)
    xb = x.astype(jnp.bfloat16)

    xp = jnp.dot(wp_ref[...].astype(jnp.bfloat16), xb,
                 preferred_element_type=jnp.float32) + bp_ref[...]    # (S, T)
    logits = jnp.dot(anchor_t_ref[...].astype(jnp.bfloat16),
                     xp.astype(jnp.bfloat16),
                     preferred_element_type=jnp.float32)              # (Nn, T)
    lmax = jnp.max(logits, axis=0, keepdims=True)
    p = jnp.exp(logits - lmax)
    z = p * pl.reciprocal(jnp.sum(p, axis=0, keepdims=True), approx=True)

    y = jnp.dot(mproj_ref[...].astype(jnp.bfloat16), z.astype(jnp.bfloat16),
                preferred_element_type=jnp.float32)                   # (C, T)
    o_ref[...] = (x + y).astype(o_ref.dtype)


# ----------------------------------------------------------------------------
# pallas_call wrappers
# ----------------------------------------------------------------------------

def _pick_tile_and_vmem(hw, c, nn):
    """Largest lane-dense hw tile fitting a VMEM budget, plus a scoped limit."""
    budget = 20 << 20  # bytes for the double-buffered streamed blocks
    tile = None
    for t in (8192, 4096, 2048, 1024, 512, 256, 128):
        # pass 3: 2x in + 2x out f32 (C, T) blocks dominate
        if hw % t == 0 and 16 * c * t <= budget:
            tile = t
            break
    if tile is None:
        # TODO(synk): hw not a multiple of 128 -> single full-hw block; a
        # masked cdiv tiling would be needed for very large non-aligned hw.
        tile = hw
    need = 16 * c * tile + 8 * tile + 8 * nn * hw + (4 << 20)
    vmem_limit = int(min(max(32 << 20, need), 56 << 20))
    return tile, vmem_limit


def _compute_anchor_t(x2, m2, wp, bp, a, tile, vmem_limit):
    n, c, hw = x2.shape
    s = wp.shape[0]
    nn = a.shape[0]
    return pl.pallas_call(
        _anchor_kernel,
        out_shape=jax.ShapeDtypeStruct((n, nn, s), jnp.float32),
        grid=(n, hw // tile),
        in_specs=[
            pl.BlockSpec((None, c, tile), lambda b, t: (b, 0, t)),
            pl.BlockSpec((None, 1, tile), lambda b, t: (b, 0, t)),
            pl.BlockSpec((s, c), lambda b, t: (0, 0)),
            pl.BlockSpec((s, 1), lambda b, t: (0, 0)),
            pl.BlockSpec((nn, hw), lambda b, t: (0, 0)),   # VMEM-resident
        ],
        out_specs=pl.BlockSpec((None, nn, s), lambda b, t: (b, 0, 0)),
        compiler_params=pltpu.CompilerParams(
            dimension_semantics=("parallel", "arbitrary"),
            vmem_limit_bytes=vmem_limit),
    )(x2, m2, wp, bp, a)


def _compute_node_state(x2, wsp, bsp, anchor_t, tile, vmem_limit):
    n, c, hw = x2.shape
    s2 = wsp.shape[0]
    s = s2 // 2
    nn = anchor_t.shape[1]
    return pl.pallas_call(
        _node_state_kernel,
        out_shape=jax.ShapeDtypeStruct((n, s, nn), jnp.float32),
        grid=(n, hw // tile),
        in_specs=[
            pl.BlockSpec((None, c, tile), lambda b, t: (b, 0, t)),
            pl.BlockSpec((s2, c), lambda b, t: (0, 0)),
            pl.BlockSpec((s2, 1), lambda b, t: (0, 0)),
            pl.BlockSpec((None, nn, s), lambda b, t: (b, 0, 0)),
        ],
        out_specs=pl.BlockSpec((None, s, nn), lambda b, t: (b, 0, 0)),
        compiler_params=pltpu.CompilerParams(
            dimension_semantics=("parallel", "arbitrary"),
            vmem_limit_bytes=vmem_limit),
    )(x2, wsp, bsp, anchor_t)


def _compute_output(x2, wp, bp, anchor_t, mproj, tile, vmem_limit):
    n, c, hw = x2.shape
    s = wp.shape[0]
    nn = anchor_t.shape[1]
    return pl.pallas_call(
        _output_kernel,
        out_shape=jax.ShapeDtypeStruct((n, c, hw), x2.dtype),
        grid=(n, hw // tile),
        in_specs=[
            pl.BlockSpec((None, c, tile), lambda b, t: (b, 0, t)),
            pl.BlockSpec((s, c), lambda b, t: (0, 0)),
            pl.BlockSpec((s, 1), lambda b, t: (0, 0)),
            pl.BlockSpec((None, nn, s), lambda b, t: (b, 0, 0)),
            pl.BlockSpec((None, c, nn), lambda b, t: (b, 0, 0)),
        ],
        out_specs=pl.BlockSpec((None, c, tile), lambda b, t: (b, 0, t)),
        compiler_params=pltpu.CompilerParams(
            dimension_semantics=("parallel", "parallel"),
            vmem_limit_bytes=vmem_limit),
    )(x2, wp, bp, anchor_t, mproj)


# ----------------------------------------------------------------------------
# Host-side helpers (tiny glue, static shapes)
# ----------------------------------------------------------------------------

def _anchor_pool_matrix(h, w, mids):
    """Constant matrix A (mids*mids, h*w) such that A @ vec(img) equals
    AdaptiveAvgPool2d(mids+2)(img)[1:-1, 1:-1].reshape(-1)."""
    def pool_rows(size, out):
        p = np.zeros((out, size), np.float32)
        for i in range(out):
            lo = (i * size) // out
            hi = -((-((i + 1) * size)) // out)        # ceil
            p[i, lo:hi] = 1.0 / (hi - lo)
        return p
    ph = pool_rows(h, mids + 2)[1:-1]                 # (mids, h)
    pw = pool_rows(w, mids + 2)[1:-1]                 # (mids, w)
    a = np.einsum("iy,jx->ijyx", ph, pw).reshape(mids * mids, h * w)
    return jnp.asarray(a)


def _nearest_upsample_1ch(m, h, w):
    # F.upsample(..., (h, w)) default mode='nearest' on a 1-channel map.
    he, we = m.shape[2], m.shape[3]
    ih = (jnp.arange(h) * he) // h
    iw = (jnp.arange(w) * we) // w
    return m[:, :, ih, :][:, :, :, iw]


# ----------------------------------------------------------------------------
# Parameters & forward pass
# ----------------------------------------------------------------------------

def init_gram_linear_params(key, num_in=96, plane_mid=64, mids=4):
    num_s = int(plane_mid)
    num_n = mids * mids
    ks = jax.random.split(key, 8)
    std = 0.1
    return {
        # Conv2d(num_in, num_s, 1): weight (num_s, num_in, 1, 1) -> (num_s, num_in)
        "w_state": std * jax.random.normal(ks[0], (num_s, num_in), jnp.float32),
        "b_state": std * jax.random.normal(ks[1], (num_s, 1), jnp.float32),
        "w_proj": std * jax.random.normal(ks[2], (num_s, num_in), jnp.float32),
        "b_proj": std * jax.random.normal(ks[3], (num_s, 1), jnp.float32),
        # GCN: Conv1d(num_n, num_n, 1) weight -> (num_n, num_n)
        "gcn_w1": std * jax.random.normal(ks[4], (num_n, num_n), jnp.float32),
        "gcn_b1": std * jax.random.normal(ks[5], (1, num_n), jnp.float32),
        # Conv1d(num_s, num_s, 1, bias=False)
        "gcn_w2": std * jax.random.normal(ks[6], (num_s, num_s), jnp.float32),
        # Conv2d(num_s, num_in, 1, bias=False) -> (num_in, num_s)
        "w_extend": std * jax.random.normal(ks[7], (num_in, num_s), jnp.float32),
    }


@jax.jit
def gram_linear_forward(x, edge, params):
    """x: (n, num_in, h, w), edge: (n, >=2, he, we)  ->  (n, num_in, h, w)."""
    n, c, h, w = x.shape
    hw = h * w
    nn = params["gcn_w1"].shape[0]
    mids = int(round(math.sqrt(nn)))          # static (derived from shapes)

    # Edge softmax on the tiny low-res map, then nearest-upsample the single
    # fg-probability channel (softmax commutes with nearest upsampling).
    m_small = jax.nn.softmax(edge, axis=1)[:, 1:2]
    m2 = _nearest_upsample_1ch(m_small, h, w).reshape(n, 1, hw)

    x2 = x.reshape(n, c, hw)                  # channels on sublanes, hw on lanes
    a = _anchor_pool_matrix(h, w, mids)       # (nn, hw) constant
    tile, vmem_limit = _pick_tile_and_vmem(hw, c, nn)

    # Stacked state/proj weights for pass 2 (one MXU push instead of two).
    wsp = jnp.concatenate([params["w_state"], params["w_proj"]], axis=0)
    bsp = jnp.concatenate([params["b_state"], params["b_proj"]], axis=0)

    anchor_t = _compute_anchor_t(x2, m2, params["w_proj"], params["b_proj"],
                                 a, tile, vmem_limit)                  # (n, nn, s)
    nstate = _compute_node_state(x2, wsp, bsp, anchor_t,
                                 tile, vmem_limit)                     # (n, s, nn)

    # Tiny per-batch GCN + conv_extend folded into a single (C, Nn) matrix
    # (plain JAX, O(n*S*Nn) work) so pass 3 is one small matmul per tile.
    xn = nstate
    hgc = jnp.einsum("nsj,ij->nsi", xn, params["gcn_w1"]) + params["gcn_b1"]
    hgc = hgc - xn
    hgc = jax.nn.relu(jnp.einsum("ps,nsi->npi", params["gcn_w2"], hgc))
    mproj = jnp.einsum("cp,npi->nci", params["w_extend"], hgc)         # (n, c, nn)

    out2 = _compute_output(x2, params["w_proj"], params["b_proj"],
                           anchor_t, mproj, tile, vmem_limit)          # (n, c, hw)
    return out2.reshape(n, c, h, w)


def gram_linear_reference(x, edge, params):
    """Pure-JAX reference of the same forward (f32 everywhere)."""
    n, c, h, w = x.shape
    hw = h * w
    nn = params["gcn_w1"].shape[0]
    mids = int(round(math.sqrt(nn)))

    m_small = jax.nn.softmax(edge, axis=1)[:, 1:2]
    m2 = _nearest_upsample_1ch(m_small, h, w).reshape(n, 1, hw)
    x2 = x.reshape(n, c, hw)
    a = _anchor_pool_matrix(h, w, mids)

    xs = jnp.einsum("sc,nct->nst", params["w_state"], x2) + params["b_state"]
    xp = jnp.einsum("sc,nct->nst", params["w_proj"], x2) + params["b_proj"]
    xm = xp * m2
    anchor = jnp.einsum("kt,nst->nsk", a, xm)                # (n, S, Nn)
    logits = jnp.einsum("nsk,nst->nkt", anchor, xp)          # (n, Nn, hw)
    z = jax.nn.softmax(logits, axis=1)
    xn = jnp.einsum("nst,nkt->nsk", xs, z)                   # (n, S, Nn)
    h1 = jnp.einsum("nsj,ij->nsi", xn, params["gcn_w1"]) + params["gcn_b1"]
    hgc = jax.nn.relu(jnp.einsum("ps,nsi->npi", params["gcn_w2"], h1 - xn))
    y = jnp.einsum("cp,npk,nkt->nct", params["w_extend"], hgc, z)
    return (x2 + y).reshape(n, c, h, w)


# ----------------------------------------------------------------------------
# Main
# ----------------------------------------------------------------------------

if __name__ == "__main__":
    # Small shapes consistent with the module interface.
    n = 2
    num_in = 32
    plane_mid = 16
    mids = 4
    h = w = 16

    key = jax.random.PRNGKey(0)
    kx, ke, kp = jax.random.split(key, 3)

    params = init_gram_linear_params(kp, num_in, plane_mid, mids)
    x = jax.random.normal(kx, (n, num_in, h, w), jnp.float32)
    edge = jax.random.normal(ke, (n, 2, h // 2, w // 2), jnp.float32)

    out = gram_linear_forward(x, edge, params)
    jax.block_until_ready(out)

    assert out.shape == (n, num_in, h, w), out.shape
    assert jnp.isfinite(out).all()

    # Loose tolerance: kernels use bf16 MXU operands (f32 accumulation) and an
    # approximate-reciprocal softmax denominator.
    ref = gram_linear_reference(x, edge, params)
    np.testing.assert_allclose(np.asarray(out), np.asarray(ref),
                               rtol=5e-2, atol=5e-2)

    print("KERNEL_OK")
</pallas_src>

<mosaic_0001>
module attributes {stable_mosaic.version = 11 : i64} {
  func.func @_anchor_kernel(%arg0: i32, %arg1: i32, %arg2: memref<1x32x256xf32, #tpu.memory_space<vmem>>, %arg3: memref<1x1x256xf32, #tpu.memory_space<vmem>>, %arg4: memref<16x32xf32, #tpu.memory_space<vmem>>, %arg5: memref<16x1xf32, #tpu.memory_space<vmem>>, %arg6: memref<16x256xf32, #tpu.memory_space<vmem>>, %arg7: memref<1x16x16xf32, #tpu.memory_space<vmem>>) attributes {dimension_semantics = [#tpu.dimension_semantics<parallel>, #tpu.dimension_semantics<arbitrary>], iteration_bounds = array<i64: 2, 1>, scalar_prefetch = 0 : i64, scratch_operands = 0 : i64, tpu.core_type = #tpu.core_type<tc>, window_params = [{transform_indices = @transform_0, window_bounds = array<i64: 1, 32, 256>}, {transform_indices = @transform_1, window_bounds = array<i64: 1, 1, 256>}, {pipeline_mode = #tpu.pipeline_mode<synchronous>, transform_indices = @transform_2, window_bounds = array<i64: 16, 32>}, {pipeline_mode = #tpu.pipeline_mode<synchronous>, transform_indices = @transform_3, window_bounds = array<i64: 16, 1>}, {pipeline_mode = #tpu.pipeline_mode<synchronous>, transform_indices = @transform_4, window_bounds = array<i64: 16, 256>}, {transform_indices = @transform_5, window_bounds = array<i64: 1, 16, 16>}]} {
    %c0_i32 = arith.constant 0 : i32
    %0 = arith.cmpi eq, %arg1, %c0_i32 : i32
    %1 = arith.extui %0 : i1 to i32
    %c0_i32_0 = arith.constant 0 : i32
    %2 = arith.cmpi ne, %1, %c0_i32_0 : i32
    scf.if %2 {
      %cst_18 = arith.constant 0.000000e+00 : f32
      %29 = vector.broadcast %cst_18 : f32 to vector<16x16xf32>
      %c0_19 = arith.constant 0 : index
      %c0_20 = arith.constant 0 : index
      %c0_21 = arith.constant 0 : index
      %30 = vector.load %arg7[%c0_19, %c0_20, %c0_21] : memref<1x16x16xf32, #tpu.memory_space<vmem>>, vector<1x16x16xf32>
      %31 = vector.shape_cast %30 : vector<1x16x16xf32> to vector<16x16xf32>
      %32 = vector.shape_cast %29 : vector<16x16xf32> to vector<1x16x16xf32>
      tpu.vector_store %arg7[%c0_19, %c0_20, %c0_21], %32 {strides = array<i32>} : memref<1x16x16xf32, #tpu.memory_space<vmem>>, vector<1x16x16xf32>,
    } else {
    }
    %c0 = arith.constant 0 : index
    %c0_1 = arith.constant 0 : index
    %c0_2 = arith.constant 0 : index
    %3 = vector.load %arg2[%c0, %c0_1, %c0_2] : memref<1x32x256xf32, #tpu.memory_space<vmem>>, vector<1x32x256xf32>
    %4 = vector.shape_cast %3 : vector<1x32x256xf32> to vector<32x256xf32>
    %5 = arith.truncf %4 : vector<32x256xf32> to vector<32x256xbf16>
    %c0_3 = arith.constant 0 : index
    %c0_4 = arith.constant 0 : index
    %c0_5 = arith.constant 0 : index
    %6 = vector.load %arg3[%c0_3, %c0_4, %c0_5] : memref<1x1x256xf32, #tpu.memory_space<vmem>>, vector<1x1x256xf32>
    %7 = vector.shape_cast %6 : vector<1x1x256xf32> to vector<1x256xf32>
    %c0_6 = arith.constant 0 : index
    %c0_7 = arith.constant 0 : index
    %8 = vector.load %arg4[%c0_6, %c0_7] : memref<16x32xf32, #tpu.memory_space<vmem>>, vector<16x32xf32>
    %9 = arith.truncf %8 : vector<16x32xf32> to vector<16x32xbf16>
    %cst = arith.constant dense<0.000000e+00> : vector<16x256xf32>
    %10 = tpu.matmul %9, %5, %cst {dimension_numbers = #tpu.dot_dimension_numbers<[1], [0], [0], [1], [0, 0, 1, 1], [], []>} : vector<16x32xbf16>, vector<32x256xbf16>, vector<16x256xf32> -> vector<16x256xf32>
    %c0_8 = arith.constant 0 : index
    %c0_9 = arith.constant 0 : index
    %11 = vector.load %arg5[%c0_8, %c0_9] : memref<16x1xf32, #tpu.memory_space<vmem>>, vector<16x1xf32>
    %12 = vector.broadcast %11 : vector<16x1xf32> to vector<16x256xf32>
    %13 = arith.addf %10, %12 : vector<16x256xf32>
    %14 = vector.broadcast %7 : vector<1x256xf32> to vector<16x256xf32>
    %15 = arith.mulf %13, %14 : vector<16x256xf32>
    %16 = arith.truncf %15 : vector<16x256xf32> to vector<16x256xbf16>
    %c256_i32 = arith.constant 256 : i32
    %17 = arith.muli %arg1, %c256_i32 : i32
    %18 = tpu.assume_multiple %17, 128 : i32
    %c0_10 = arith.constant 0 : index
    %19 = arith.index_cast %18 : i32 to index
    %20 = vector.load %arg6[%c0_10, %19] : memref<16x256xf32, #tpu.memory_space<vmem>>, vector<16x256xf32>
    %21 = arith.truncf %20 : vector<16x256xf32> to vector<16x256xbf16>
    %c0_11 = arith.constant 0 : index
    %c0_12 = arith.constant 0 : index
    %c0_13 = arith.constant 0 : index
    %22 = vector.load %arg7[%c0_11, %c0_12, %c0_13] : memref<1x16x16xf32, #tpu.memory_space<vmem>>, vector<1x16x16xf32>
    %23 = vector.shape_cast %22 : vector<1x16x16xf32> to vector<16x16xf32>
    %cst_14 = arith.constant dense<0.000000e+00> : vector<16x16xf32>
    %24 = tpu.matmul %21, %16, %cst_14 {dimension_numbers = #tpu.dot_dimension_numbers<[1], [1], [0], [0], [0, 0, 1, 0], [], []>} : vector<16x256xbf16>, vector<16x256xbf16>, vector<16x16xf32> -> vector<16x16xf32>
    %25 = arith.addf %23, %24 : vector<16x16xf32>
    %c0_15 = arith.constant 0 : index
    %c0_16 = arith.constant 0 : index
    %c0_17 = arith.constant 0 : index
    %26 = vector.load %arg7[%c0_15, %c0_16, %c0_17] : memref<1x16x16xf32, #tpu.memory_space<vmem>>, vector<1x16x16xf32>
    %27 = vector.shape_cast %26 : vector<1x16x16xf32> to vector<16x16xf32>
    %28 = vector.shape_cast %25 : vector<16x16xf32> to vector<1x16x16xf32>
    tpu.vector_store %arg7[%c0_15, %c0_16, %c0_17], %28 {strides = array<i32>} : memref<1x16x16xf32, #tpu.memory_space<vmem>>, vector<1x16x16xf32>,
    return
  }
  func.func @transform_0(%arg0: i32, %arg1: i32) -> (i32, i32, i32) {
    %c0_i32 = arith.constant 0 : i32
    %c0_i32_0 = arith.constant 0 : i32
    return %arg0, %c0_i32, %arg1 : i32, i32, i32
  }
  func.func @transform_1(%arg0: i32, %arg1: i32) -> (i32, i32, i32) {
    %c0_i32 = arith.constant 0 : i32
    %c0_i32_0 = arith.constant 0 : i32
    return %arg0, %c0_i32, %arg1 : i32, i32, i32
  }
  func.func @transform_2(%arg0: i32, %arg1: i32) -> (i32, i32) {
    %c0_i32 = arith.constant 0 : i32
    %c0_i32_0 = arith.constant 0 : i32
    %c0_i32_1 = arith.constant 0 : i32
    return %c0_i32, %c0_i32_0 : i32, i32
  }
  func.func @transform_3(%arg0: i32, %arg1: i32) -> (i32, i32) {
    %c0_i32 = arith.constant 0 : i32
    %c0_i32_0 = arith.constant 0 : i32
    %c0_i32_1 = arith.constant 0 : i32
    return %c0_i32, %c0_i32_0 : i32, i32
  }
  func.func @transform_4(%arg0: i32, %arg1: i32) -> (i32, i32) {
    %c0_i32 = arith.constant 0 : i32
    %c0_i32_0 = arith.constant 0 : i32
    %c0_i32_1 = arith.constant 0 : i32
    return %c0_i32, %c0_i32_0 : i32, i32
  }
  func.func @transform_5(%arg0: i32, %arg1: i32) -> (i32, i32, i32) {
    %c0_i32 = arith.constant 0 : i32
    %c0_i32_0 = arith.constant 0 : i32
    %c0_i32_1 = arith.constant 0 : i32
    return %arg0, %c0_i32, %c0_i32_0 : i32, i32, i32
  }
}

module attributes {stable_mosaic.version = 11 : i64} {
  func.func @_node_state_kernel(%arg0: i32, %arg1: i32, %arg2: memref<1x32x256xf32, #tpu.memory_space<vmem>>, %arg3: memref<32x32xf32, #tpu.memory_space<vmem>>, %arg4: memref<32x1xf32, #tpu.memory_space<vmem>>, %arg5: memref<1x16x16xf32, #tpu.memory_space<vmem>>, %arg6: memref<1x16x16xf32, #tpu.memory_space<vmem>>) attributes {dimension_semantics = [#tpu.dimension_semantics<parallel>, #tpu.dimension_semantics<arbitrary>], iteration_bounds = array<i64: 2, 1>, scalar_prefetch = 0 : i64, scratch_operands = 0 : i64, tpu.core_type = #tpu.core_type<tc>, window_params = [{transform_indices = @transform_0, window_bounds = array<i64: 1, 32, 256>}, {pipeline_mode = #tpu.pipeline_mode<synchronous>, transform_indices = @transform_1, window_bounds = array<i64: 32, 32>}, {pipeline_mode = #tpu.pipeline_mode<synchronous>, transform_indices = @transform_2, window_bounds = array<i64: 32, 1>}, {transform_indices = @transform_3, window_bounds = array<i64: 1, 16, 16>}, {transform_indices = @transform_4, window_bounds = array<i64: 1, 16, 16>}]} {
    %c0_i32 = arith.constant 0 : i32
    %0 = arith.cmpi eq, %arg1, %c0_i32 : i32
    %1 = arith.extui %0 : i1 to i32
    %c0_i32_0 = arith.constant 0 : i32
    %2 = arith.cmpi ne, %1, %c0_i32_0 : i32
    scf.if %2 {
      %cst_20 = arith.constant 0.000000e+00 : f32
      %38 = vector.broadcast %cst_20 : f32 to vector<16x16xf32>
      %c0_21 = arith.constant 0 : index
      %c0_22 = arith.constant 0 : index
      %c0_23 = arith.constant 0 : index
      %39 = vector.load %arg6[%c0_21, %c0_22, %c0_23] : memref<1x16x16xf32, #tpu.memory_space<vmem>>, vector<1x16x16xf32>
      %40 = vector.shape_cast %39 : vector<1x16x16xf32> to vector<16x16xf32>
      %41 = vector.shape_cast %38 : vector<16x16xf32> to vector<1x16x16xf32>
      tpu.vector_store %arg6[%c0_21, %c0_22, %c0_23], %41 {strides = array<i32>} : memref<1x16x16xf32, #tpu.memory_space<vmem>>, vector<1x16x16xf32>,
    } else {
    }
    %c0 = arith.constant 0 : index
    %c0_1 = arith.constant 0 : index
    %c0_2 = arith.constant 0 : index
    %3 = vector.load %arg2[%c0, %c0_1, %c0_2] : memref<1x32x256xf32, #tpu.memory_space<vmem>>, vector<1x32x256xf32>
    %4 = vector.shape_cast %3 : vector<1x32x256xf32> to vector<32x256xf32>
    %5 = arith.truncf %4 : vector<32x256xf32> to vector<32x256xbf16>
    %c0_3 = arith.constant 0 : index
    %c0_4 = arith.constant 0 : index
    %6 = vector.load %arg3[%c0_3, %c0_4] : memref<32x32xf32, #tpu.memory_space<vmem>>, vector<32x32xf32>
    %7 = arith.truncf %6 : vector<32x32xf32> to vector<32x32xbf16>
    %cst = arith.constant dense<0.000000e+00> : vector<32x256xf32>
    %8 = tpu.matmul %7, %5, %cst {dimension_numbers = #tpu.dot_dimension_numbers<[1], [0], [0], [1], [0, 0, 1, 1], [], []>} : vector<32x32xbf16>, vector<32x256xbf16>, vector<32x256xf32> -> vector<32x256xf32>
    %c0_5 = arith.constant 0 : index
    %c0_6 = arith.constant 0 : index
    %9 = vector.load %arg4[%c0_5, %c0_6] : memref<32x1xf32, #tpu.memory_space<vmem>>, vector<32x1xf32>
    %10 = vector.broadcast %9 : vector<32x1xf32> to vector<32x256xf32>
    %11 = arith.addf %8, %10 : vector<32x256xf32>
    %12 = vector.extract_strided_slice %11 {offsets = [0, 0], sizes = [16, 256], strides = [1, 1]} : vector<32x256xf32> to vector<16x256xf32>
    %13 = vector.extract_strided_slice %11 {offsets = [16, 0], sizes = [16, 256], strides = [1, 1]} : vector<32x256xf32> to vector<16x256xf32>
    %c0_7 = arith.constant 0 : index
    %c0_8 = arith.constant 0 : index
    %c0_9 = arith.constant 0 : index
    %14 = vector.load %arg5[%c0_7, %c0_8, %c0_9] : memref<1x16x16xf32, #tpu.memory_space<vmem>>, vector<1x16x16xf32>
    %15 = vector.shape_cast %14 : vector<1x16x16xf32> to vector<16x16xf32>
    %16 = arith.truncf %15 : vector<16x16xf32> to vector<16x16xbf16>
    %17 = arith.truncf %13 : vector<16x256xf32> to vector<16x256xbf16>
    %cst_10 = arith.constant dense<0.000000e+00> : vector<16x256xf32>
    %18 = tpu.matmul %16, %17, %cst_10 {dimension_numbers = #tpu.dot_dimension_numbers<[1], [0], [0], [1], [0, 0, 1, 1], [], []>} : vector<16x16xbf16>, vector<16x256xbf16>, vector<16x256xf32> -> vector<16x256xf32>
    %cst_11 = arith.constant dense<0xFF800000> : vector<256xf32>
    %19 = vector.multi_reduction <maximumf>, %18, %cst_11 [0] : vector<16x256xf32> to vector<256xf32>
    %20 = vector.shape_cast %19 : vector<256xf32> to vector<1x256xf32>
    %21 = vector.broadcast %20 : vector<1x256xf32> to vector<16x256xf32>
    %22 = arith.subf %18, %21 : vector<16x256xf32>
    %23 = math.exp %22 : vector<16x256xf32>
    %cst_12 = arith.constant dense<0.000000e+00> : vector<256xf32>
    %24 = vector.multi_reduction <add>, %23, %cst_12 [0] : vector<16x256xf32> to vector<256xf32>
    %25 = vector.shape_cast %24 : vector<256xf32> to vector<1x256xf32>
    %26 = tpu.reciprocal %25 {approx = true} : vector<1x256xf32> -> vector<1x256xf32>
    %27 = vector.broadcast %26 : vector<1x256xf32> to vector<16x256xf32>
    %28 = arith.mulf %23, %27 : vector<16x256xf32>
    %c0_13 = arith.constant 0 : index
    %c0_14 = arith.constant 0 : index
    %c0_15 = arith.constant 0 : index
    %29 = vector.load %arg6[%c0_13, %c0_14, %c0_15] : memref<1x16x16xf32, #tpu.memory_space<vmem>>, vector<1x16x16xf32>
    %30 = vector.shape_cast %29 : vector<1x16x16xf32> to vector<16x16xf32>
    %31 = arith.truncf %12 : vector<16x256xf32> to vector<16x256xbf16>
    %32 = arith.truncf %28 : vector<16x256xf32> to vector<16x256xbf16>
    %cst_16 = arith.constant dense<0.000000e+00> : vector<16x16xf32>
    %33 = tpu.matmul %31, %32, %cst_16 {dimension_numbers = #tpu.dot_dimension_numbers<[1], [1], [0], [0], [0, 0, 1, 0], [], []>} : vector<16x256xbf16>, vector<16x256xbf16>, vector<16x16xf32> -> vector<16x16xf32>
    %34 = arith.addf %30, %33 : vector<16x16xf32>
    %c0_17 = arith.constant 0 : index
    %c0_18 = arith.constant 0 : index
    %c0_19 = arith.constant 0 : index
    %35 = vector.load %arg6[%c0_17, %c0_18, %c0_19] : memref<1x16x16xf32, #tpu.memory_space<vmem>>, vector<1x16x16xf32>
    %36 = vector.shape_cast %35 : vector<1x16x16xf32> to vector<16x16xf32>
    %37 = vector.shape_cast %34 : vector<16x16xf32> to vector<1x16x16xf32>
    tpu.vector_store %arg6[%c0_17, %c0_18, %c0_19], %37 {strides = array<i32>} : memref<1x16x16xf32, #tpu.memory_space<vmem>>, vector<1x16x16xf32>,
    return
  }
  func.func @transform_0(%arg0: i32, %arg1: i32) -> (i32, i32, i32) {
    %c0_i32 = arith.constant 0 : i32
    %c0_i32_0 = arith.constant 0 : i32
    return %arg0, %c0_i32, %arg1 : i32, i32, i32
  }
  func.func @transform_1(%arg0: i32, %arg1: i32) -> (i32, i32) {
    %c0_i32 = arith.constant 0 : i32
    %c0_i32_0 = arith.constant 0 : i32
    %c0_i32_1 = arith.constant 0 : i32
    return %c0_i32, %c0_i32_0 : i32, i32
  }
  func.func @transform_2(%arg0: i32, %arg1: i32) -> (i32, i32) {
    %c0_i32 = arith.constant 0 : i32
    %c0_i32_0 = arith.constant 0 : i32
    %c0_i32_1 = arith.constant 0 : i32
    return %c0_i32, %c0_i32_0 : i32, i32
  }
  func.func @transform_3(%arg0: i32, %arg1: i32) -> (i32, i32, i32) {
    %c0_i32 = arith.constant 0 : i32
    %c0_i32_0 = arith.constant 0 : i32
    %c0_i32_1 = arith.constant 0 : i32
    return %arg0, %c0_i32, %c0_i32_0 : i32, i32, i32
  }
  func.func @transform_4(%arg0: i32, %arg1: i32) -> (i32, i32, i32) {
    %c0_i32 = arith.constant 0 : i32
    %c0_i32_0 = arith.constant 0 : i32
    %c0_i32_1 = arith.constant 0 : i32
    return %arg0, %c0_i32, %c0_i32_0 : i32, i32, i32
  }
}

module attributes {stable_mosaic.version = 11 : i64} {
  func.func @_output_kernel(%arg0: i32, %arg1: i32, %arg2: memref<1x32x256xf32, #tpu.memory_space<vmem>>, %arg3: memref<16x32xf32, #tpu.memory_space<vmem>>, %arg4: memref<16x1xf32, #tpu.memory_space<vmem>>, %arg5: memref<1x16x16xf32, #tpu.memory_space<vmem>>, %arg6: memref<1x32x16xf32, #tpu.memory_space<vmem>>, %arg7: memref<1x32x256xf32, #tpu.memory_space<vmem>>) attributes {dimension_semantics = [#tpu.dimension_semantics<parallel>, #tpu.dimension_semantics<parallel>], iteration_bounds = array<i64: 2, 1>, scalar_prefetch = 0 : i64, scratch_operands = 0 : i64, tpu.core_type = #tpu.core_type<tc>, window_params = [{transform_indices = @transform_0, window_bounds = array<i64: 1, 32, 256>}, {pipeline_mode = #tpu.pipeline_mode<synchronous>, transform_indices = @transform_1, window_bounds = array<i64: 16, 32>}, {pipeline_mode = #tpu.pipeline_mode<synchronous>, transform_indices = @transform_2, window_bounds = array<i64: 16, 1>}, {transform_indices = @transform_3, window_bounds = array<i64: 1, 16, 16>}, {transform_indices = @transform_4, window_bounds = array<i64: 1, 32, 16>}, {transform_indices = @transform_5, window_bounds = array<i64: 1, 32, 256>}]} {
    %c0 = arith.constant 0 : index
    %c0_0 = arith.constant 0 : index
    %c0_1 = arith.constant 0 : index
    %0 = vector.load %arg2[%c0, %c0_0, %c0_1] : memref<1x32x256xf32, #tpu.memory_space<vmem>>, vector<1x32x256xf32>
    %1 = vector.shape_cast %0 : vector<1x32x256xf32> to vector<32x256xf32>
    %2 = arith.truncf %1 : vector<32x256xf32> to vector<32x256xbf16>
    %c0_2 = arith.constant 0 : index
    %c0_3 = arith.constant 0 : index
    %3 = vector.load %arg3[%c0_2, %c0_3] : memref<16x32xf32, #tpu.memory_space<vmem>>, vector<16x32xf32>
    %4 = arith.truncf %3 : vector<16x32xf32> to vector<16x32xbf16>
    %cst = arith.constant dense<0.000000e+00> : vector<16x256xf32>
    %5 = tpu.matmul %4, %2, %cst {dimension_numbers = #tpu.dot_dimension_numbers<[1], [0], [0], [1], [0, 0, 1, 1], [], []>} : vector<16x32xbf16>, vector<32x256xbf16>, vector<16x256xf32> -> vector<16x256xf32>
    %c0_4 = arith.constant 0 : index
    %c0_5 = arith.constant 0 : index
    %6 = vector.load %arg4[%c0_4, %c0_5] : memref<16x1xf32, #tpu.memory_space<vmem>>, vector<16x1xf32>
    %7 = vector.broadcast %6 : vector<16x1xf32> to vector<16x256xf32>
    %8 = arith.addf %5, %7 : vector<16x256xf32>
    %c0_6 = arith.constant 0 : index
    %c0_7 = arith.constant 0 : index
    %c0_8 = arith.constant 0 : index
    %9 = vector.load %arg5[%c0_6, %c0_7, %c0_8] : memref<1x16x16xf32, #tpu.memory_space<vmem>>, vector<1x16x16xf32>
    %10 = vector.shape_cast %9 : vector<1x16x16xf32> to vector<16x16xf32>
    %11 = arith.truncf %10 : vector<16x16xf32> to vector<16x16xbf16>
    %12 = arith.truncf %8 : vector<16x256xf32> to vector<16x256xbf16>
    %cst_9 = arith.constant dense<0.000000e+00> : vector<16x256xf32>
    %13 = tpu.matmul %11, %12, %cst_9 {dimension_numbers = #tpu.dot_dimension_numbers<[1], [0], [0], [1], [0, 0, 1, 1], [], []>} : vector<16x16xbf16>, vector<16x256xbf16>, vector<16x256xf32> -> vector<16x256xf32>
    %cst_10 = arith.constant dense<0xFF800000> : vector<256xf32>
    %14 = vector.multi_reduction <maximumf>, %13, %cst_10 [0] : vector<16x256xf32> to vector<256xf32>
    %15 = vector.shape_cast %14 : vector<256xf32> to vector<1x256xf32>
    %16 = vector.broadcast %15 : vector<1x256xf32> to vector<16x256xf32>
    %17 = arith.subf %13, %16 : vector<16x256xf32>
    %18 = math.exp %17 : vector<16x256xf32>
    %cst_11 = arith.constant dense<0.000000e+00> : vector<256xf32>
    %19 = vector.multi_reduction <add>, %18, %cst_11 [0] : vector<16x256xf32> to vector<256xf32>
    %20 = vector.shape_cast %19 : vector<256xf32> to vector<1x256xf32>
    %21 = tpu.reciprocal %20 {approx = true} : vector<1x256xf32> -> vector<1x256xf32>
    %22 = vector.broadcast %21 : vector<1x256xf32> to vector<16x256xf32>
    %23 = arith.mulf %18, %22 : vector<16x256xf32>
    %c0_12 = arith.constant 0 : index
    %c0_13 = arith.constant 0 : index
    %c0_14 = arith.constant 0 : index
    %24 = vector.load %arg6[%c0_12, %c0_13, %c0_14] : memref<1x32x16xf32, #tpu.memory_space<vmem>>, vector<1x32x16xf32>
    %25 = vector.shape_cast %24 : vector<1x32x16xf32> to vector<32x16xf32>
    %26 = arith.truncf %25 : vector<32x16xf32> to vector<32x16xbf16>
    %27 = arith.truncf %23 : vector<16x256xf32> to vector<16x256xbf16>
    %cst_15 = arith.constant dense<0.000000e+00> : vector<32x256xf32>
    %28 = tpu.matmul %26, %27, %cst_15 {dimension_numbers = #tpu.dot_dimension_numbers<[1], [0], [0], [1], [0, 0, 1, 1], [], []>} : vector<32x16xbf16>, vector<16x256xbf16>, vector<32x256xf32> -> vector<32x256xf32>
    %29 = arith.addf %1, %28 : vector<32x256xf32>
    %c0_16 = arith.constant 0 : index
    %c0_17 = arith.constant 0 : index
    %c0_18 = arith.constant 0 : index
    %30 = vector.load %arg7[%c0_16, %c0_17, %c0_18] : memref<1x32x256xf32, #tpu.memory_space<vmem>>, vector<1x32x256xf32>
    %31 = vector.shape_cast %30 : vector<1x32x256xf32> to vector<32x256xf32>
    %32 = vector.shape_cast %29 : vector<32x256xf32> to vector<1x32x256xf32>
    tpu.vector_store %arg7[%c0_16, %c0_17, %c0_18], %32 {strides = array<i32>} : memref<1x32x256xf32, #tpu.memory_space<vmem>>, vector<1x32x256xf32>,
    return
  }
  func.func @transform_0(%arg0: i32, %arg1: i32) -> (i32, i32, i32) {
    %c0_i32 = arith.constant 0 : i32
    %c0_i32_0 = arith.constant 0 : i32
    return %arg0, %c0_i32, %arg1 : i32, i32, i32
  }
  func.func @transform_1(%arg0: i32, %arg1: i32) -> (i32, i32) {
    %c0_i32 = arith.constant 0 : i32
    %c0_i32_0 = arith.constant 0 : i32
    %c0_i32_1 = arith.constant 0 : i32
    return %c0_i32, %c0_i32_0 : i32, i32
  }
  func.func @transform_2(%arg0: i32, %arg1: i32) -> (i32, i32) {
    %c0_i32 = arith.constant 0 : i32
    %c0_i32_0 = arith.constant 0 : i32
    %c0_i32_1 = arith.constant 0 : i32
    return %c0_i32, %c0_i32_0 : i32, i32
  }
  func.func @transform_3(%arg0: i32, %arg1: i32) -> (i32, i32, i32) {
    %c0_i32 = arith.constant 0 : i32
    %c0_i32_0 = arith.constant 0 : i32
    %c0_i32_1 = arith.constant 0 : i32
    return %arg0, %c0_i32, %c0_i32_0 : i32, i32, i32
  }
  func.func @transform_4(%arg0: i32, %arg1: i32) -> (i32, i32, i32) {
    %c0_i32 = arith.constant 0 : i32
    %c0_i32_0 = arith.constant 0 : i32
    %c0_i32_1 = arith.constant 0 : i32
    return %arg0, %c0_i32, %c0_i32_0 : i32, i32, i32
  }
  func.func @transform_5(%arg0: i32, %arg1: i32) -> (i32, i32, i32) {
    %c0_i32 = arith.constant 0 : i32
    %c0_i32_0 = arith.constant 0 : i32
    return %arg0, %c0_i32, %arg1 : i32, i32, i32
  }
}

</mosaic_0001>

<llo_original>
// kernel: gram_linear_forward.4
$region0: #{gram_linear_forward.4}
  #allocation0 [shape = 'u32[]', space=smem, size = 0x4, offset = 0x4, fixed_abs, tag = 'smem constant byte address 0x4 - core index']
  #allocation1 [shape = 'u32[144,128]{1,0:T(1,128)}', space=vmem, size = 0x12000, scoped, tag = 'internal scratch']
  %s0 = inlined_call_operand.vmem [shape: f32[2,32,256], index: 0, kind: input, shape index: {}]
  %s1 = inlined_call_operand.vmem [shape: f32[32,32], index: 1, kind: input, shape index: {}]
  %s2 = inlined_call_operand.vmem [shape: f32[32,1], index: 2, kind: input, shape index: {}]
  %s3 = inlined_call_operand.vmem [shape: f32[2,16,16], index: 3, kind: input, shape index: {}]
  %s4 = inlined_call_operand.vmem [shape: f32[2,16,16], index: 4, kind: output, shape index: {}]
  %s5 = sld [smem:[#allocation0]]
  $region53: #{gram_linear_forward.4} parent=0
    _
  %s7 = ssub.s32 1, %s5
  %s8 = scalar_select 0, %s7, %s5
  loop: start=0, step=1, limit=4
  $region2: #{gram_linear_forward.4} parent=0 // loop_pre_header
    _
  $region3: #{gram_linear_forward.4} parent=0 // loop_header
    %s10 = sphi 0, %s14
    %p11 = scmp.ge.s32.totalorder %s10, 4
    %s17 = sphi 0, %s29
    %s18 = sphi 0, %s25
    %s19 = sphi 0, %s17
    %s20 = sphi 0, %s18
    %s21 = sphi 0, %s19
    %s22 = sphi 0, %s20
    %s34 = sphi 0, %s36
    %s37 = sphi 0, %s34
    %s38 = sphi 0, %s37
    %s54 = sphi 0, %s38
    %s58 = sphi 0, %s58
    %s60 = sphi 0, %s58
    %s61 = sphi 0, %s60
    %s75 = sphi 0, %s61
    %s79 = sphi 0, %s79
    %s81 = sphi 0, %s79
    %s82 = sphi 0, %s81
    %s96 = sphi 0, %s82
    %s102 = sphi 0, %s104
    %s105 = sphi 0, %s102
    %s106 = sphi 0, %s105
    %s122 = sphi 0, %s106
    %s128 = sphi 0, %s130
    %s131 = sphi 0, %s128
    %s132 = sphi 0, %s131
    %s148 = sphi 0, %s132
  $region4: #{gram_linear_forward.4} parent=0 // loop_header_branch
    %13 = sbr.rel (%p11) target = $region8
  $region5: #{gram_linear_forward.4} parent=0 // loop_body
    %s15 = ssub.s32 %s10, 1
    %s16 = ssub.s32 %s10, 2
    %s23 = sadd.s32 1, %s18
    %p24 = scmp.ge.s32.totalorder %s23, 1
    %s25 = scalar_select %p24, 0, %s23
    %s26 = sadd.s32 1, %s17
    %s27 = scalar_select %p24, %s26, %s17
    %p28 = scmp.ge.s32.totalorder %s27, 2
    %s29 = scalar_select %p28, 0, %s27
    %s30 = ssub.s32 %s17, %s29
    %s31 = ssub.s32 %s18, %s25
    %s32 = sor.u32 %s30, %s31
    %p33 = scmp.eq.s32.totalorder %s32, 0
    %s35 = sadd.s32 %s34, 1
    %s36 = scalar_select %p33, %s34, %s35
    %p39 = pneg %p33
    %p40 = scmp.eq.s32.totalorder %s10, 1
    %p41 = por %p39, %p40
    %p42 = scmp.ne.s32.totalorder %s34, %s37
    %p43 = scmp.eq.s32.totalorder %s10, 0
    %p44 = por %p42, %p43
    %p45 = scmp.ne.s32.totalorder %s34, %s37
    %p46 = scmp.eq.s32.totalorder %s15, 1
    %p47 = por %p45, %p46
    %p48 = scmp.ne.s32.totalorder %s37, %s38
    %p49 = scmp.eq.s32.totalorder %s15, 0
    %p50 = por %p48, %p49
    %p51 = scmp.ne.s32.totalorder %s37, %s38
    %p52 = scmp.eq.s32.totalorder %s16, 1
    %p53 = por %p51, %p52
    %p55 = scmp.ne.s32.totalorder %s38, %s54
    %p56 = scmp.eq.s32.totalorder %s16, 0
    %p57 = por %p55, %p56
    %s59 = sadd.s32 %s58, 1
    %p62 = scmp.eq.s32.totalorder %s10, 1
    %p63 = scmp.ne.s32.totalorder %s58, %s60
    %p64 = scmp.eq.s32.totalorder %s10, 0
    %p65 = por %p63, %p64
    %p66 = scmp.ne.s32.totalorder %s58, %s60
    %p67 = scmp.eq.s32.totalorder %s15, 1
    %p68 = por %p66, %p67
    %p69 = scmp.ne.s32.totalorder %s60, %s61
    %p70 = scmp.eq.s32.totalorder %s15, 0
    %p71 = por %p69, %p70
    %p72 = scmp.ne.s32.totalorder %s60, %s61
    %p73 = scmp.eq.s32.totalorder %s16, 1
    %p74 = por %p72, %p73
    %p76 = scmp.ne.s32.totalorder %s61, %s75
    %p77 = scmp.eq.s32.totalorder %s16, 0
    %p78 = por %p76, %p77
    %s80 = sadd.s32 %s79, 1
    %p83 = scmp.eq.s32.totalorder %s10, 1
    %p84 = scmp.ne.s32.totalorder %s79, %s81
    %p85 = scmp.eq.s32.totalorder %s10, 0
    %p86 = por %p84, %p85
    %p87 = scmp.ne.s32.totalorder %s79, %s81
    %p88 = scmp.eq.s32.totalorder %s15, 1
    %p89 = por %p87, %p88
    %p90 = scmp.ne.s32.totalorder %s81, %s82
    %p91 = scmp.eq.s32.totalorder %s15, 0
    %p92 = por %p90, %p91
    %p93 = scmp.ne.s32.totalorder %s81, %s82
    %p94 = scmp.eq.s32.totalorder %s16, 1
    %p95 = por %p93, %p94
    %p97 = scmp.ne.s32.totalorder %s82, %s96
    %p98 = scmp.eq.s32.totalorder %s16, 0
    %p99 = por %p97, %p98
    %s100 = ssub.s32 %s17, %s29
    %p101 = scmp.eq.s32.totalorder %s100, 0
    %s103 = sadd.s32 %s102, 1
    %s104 = scalar_select %p101, %s102, %s103
    %p107 = pneg %p101
    %p108 = scmp.eq.s32.totalorder %s10, 1
    %p109 = por %p107, %p108
    %p110 = scmp.ne.s32.totalorder %s102, %s105
    %p111 = scmp.eq.s32.totalorder %s10, 0
    %p112 = por %p110, %p111
    %p113 = scmp.ne.s32.totalorder %s102, %s105
    %p114 = scmp.eq.s32.totalorder %s15, 1
    %p115 = por %p113, %p114
    %p116 = scmp.ne.s32.totalorder %s105, %s106
    %p117 = scmp.eq.s32.totalorder %s15, 0
    %p118 = por %p116, %p117
    %p119 = scmp.ne.s32.totalorder %s105, %s106
    %p120 = scmp.eq.s32.totalorder %s16, 1
    %p121 = por %p119, %p120
    %p123 = scmp.ne.s32.totalorder %s106, %s122
    %p124 = scmp.eq.s32.totalorder %s16, 0
    %p125 = por %p123, %p124
    %s126 = ssub.s32 %s17, %s29
    %p127 = scmp.eq.s32.totalorder %s126, 0
    %s129 = sadd.s32 %s128, 1
    %s130 = scalar_select %p127, %s128, %s129
    %p133 = pneg %p127
    %p134 = scmp.eq.s32.totalorder %s10, 1
    %p135 = por %p133, %p134
    %p136 = scmp.ne.s32.totalorder %s128, %s131
    %p137 = scmp.eq.s32.totalorder %s10, 0
    %p138 = por %p136, %p137
    %p139 = scmp.ne.s32.totalorder %s128, %s131
    %p140 = scmp.eq.s32.totalorder %s15, 1
    %p141 = por %p139, %p140
    %p142 = scmp.ne.s32.totalorder %s131, %s132
    %p143 = scmp.eq.s32.totalorder %s15, 0
    %p144 = por %p142, %p143
    %p145 = scmp.ne.s32.totalorder %s131, %s132
    %p146 = scmp.eq.s32.totalorder %s16, 1
    %p147 = por %p145, %p146
    %p149 = scmp.ne.s32.totalorder %s132, %s148
    %p150 = scmp.eq.s32.totalorder %s16, 0
    %p151 = por %p149, %p150
    %p152 = scmp.le.s32.totalorder 1, %s10
    %p153 = scmp.lt.s32.totalorder %s10, 3
    %p154 = pnand %p152, %p153
    %p155 = pneg %p154
    // Predicated region
    $region9: #{gram_linear_forward.4} parent=5 // pred_check
      _
    $region10: #{gram_linear_forward.4} parent=5 // pred_check_branch
      %157 = sbr.rel (%p154) target = $region12
    $region11: #{gram_linear_forward.4} parent=5 // pred_region
      %s158 = ssub.s32 %s10, 1
      // Predicated region
      $region13: #{gram_linear_forward.4} parent=11 // pred_check
        %p159 = pneg %p71
      $region14: #{gram_linear_forward.4} parent=11 // pred_check_branch
        %161 = sbr.rel (%p159) target = $region16
      $region15: #{gram_linear_forward.4} parent=11 // pred_region
        _
      $region16: #{gram_linear_forward.4} parent=11 // pred_fallthru
        _
      // Predicated region
      $region17: #{gram_linear_forward.4} parent=11 // pred_check
        %p162 = pneg %p92
      $region18: #{gram_linear_forward.4} parent=11 // pred_check_branch
        %164 = sbr.rel (%p162) target = $region20
      $region19: #{gram_linear_forward.4} parent=11 // pred_region
        _
      $region20: #{gram_linear_forward.4} parent=11 // pred_fallthru
        _
    $region12: #{gram_linear_forward.4} parent=5 // pred_fallthru
      _
    %p165 = scmp.lt.s32.totalorder %s10, 2
    // Predicated region
    $region21: #{gram_linear_forward.4} parent=5 // pred_check
      %p166 = pneg %p165
    $region22: #{gram_linear_forward.4} parent=5 // pred_check_branch
      %168 = sbr.rel (%p166) target = $region24
    $region23: #{gram_linear_forward.4} parent=5 // pred_region
      // Predicated region
      $region25: #{gram_linear_forward.4} parent=23 // pred_check
        %p169 = pneg %p44
      $region26: #{gram_linear_forward.4} parent=23 // pred_check_branch
        %171 = sbr.rel (%p169) target = $region28
      $region27: #{gram_linear_forward.4} parent=23 // pred_region
        %s172 = smul.u32 2, %s18
        %p173 = scmp.lt.s32.totalorder %s17, 1
        %s174 = scalar_select %p173, %s17, 1
        %p175 = scmp.lt.s32.totalorder %s172, 1
        %s176 = scalar_select %p175, %s172, 1
        %s177 = smul.addr %s174, 8
        %s178 = sadd.s32 %s176, %s177
        %s179 = smul.addr %s178, 8
        %s180 = scalar_lea.vmem %s0, %s179
        %s181 = smul.u32 2, %s18
      $region28: #{gram_linear_forward.4} parent=23 // pred_fallthru
        _
      // Predicated region
      $region29: #{gram_linear_forward.4} parent=23 // pred_check
        %p182 = pneg %p112
      $region30: #{gram_linear_forward.4} parent=23 // pred_check_branch
        %184 = sbr.rel (%p182) target = $region32
      $region31: #{gram_linear_forward.4} parent=23 // pred_region
        %p185 = scmp.lt.s32.totalorder %s17, 1
        %s186 = scalar_select %p185, %s17, 1
        %s187 = smul.addr %s186, 2
        %s188 = smul.addr %s187, 8
        %s189 = scalar_lea.vmem %s3, %s188
      $region32: #{gram_linear_forward.4} parent=23 // pred_fallthru
        _
    $region24: #{gram_linear_forward.4} parent=5 // pred_fallthru
      _
    %p190 = scmp.le.s32.totalorder 1, %s10
    %p191 = scmp.lt.s32.totalorder %s10, 3
    %p192 = pnand %p190, %p191
    %p193 = pneg %p192
    // Predicated region
    $region33: #{gram_linear_forward.4} parent=5 // pred_check
      _
    $region34: #{gram_linear_forward.4} parent=5 // pred_check_branch
      %195 = sbr.rel (%p192) target = $region36
    $region35: #{gram_linear_forward.4} parent=5 // pred_region
      %s196 = ssub.s32 %s10, 1
      %s197 = smul.u32 2, %s20
      %p198 = scmp.lt.s32.totalorder %s19, 1
      %s199 = scalar_select %p198, %s19, 1
      %p200 = scmp.lt.s32.totalorder %s197, 1
      %s201 = scalar_select %p200, %s197, 1
      %s202 = smul.addr %s199, 8
      %s203 = sadd.s32 %s201, %s202
      %s204 = smul.addr %s203, 8
      %s205 = scalar_lea.vmem %s0, %s204
      %p206 = pneg %p50
      %p207 = pneg %p47
      %p208 = pneg %p71
      %p209 = pneg %p68
      %p210 = pneg %p92
      %p211 = pneg %p89
      %p212 = scmp.lt.s32.totalorder %s19, 1
      %s213 = scalar_select %p212, %s19, 1
      %s214 = smul.addr %s213, 2
      %s215 = smul.addr %s214, 8
      %s216 = scalar_lea.vmem %s3, %s215
      %p217 = pneg %p118
      %p218 = pneg %p115
      %p219 = pneg %p144
      %p220 = pneg %p141
      %p221 = scmp.lt.s32.totalorder %s19, 1
      %s222 = scalar_select %p221, %s19, 1
      %s223 = smul.addr %s222, 2
      %s224 = smul.addr %s223, 8
      %s225 = scalar_lea.vmem %s4, %s224
      %s226 = smul.u32 2, %s20
      %p227 = scmp.lt.s32.totalorder %s19, 1
      %s228 = scalar_select %p227, %s19, 1
      %p229 = scmp.lt.s32.totalorder %s226, 1
      %s230 = scalar_select %p229, %s226, 1
      %s231 = smul.addr %s228, 8
      %s232 = sadd.s32 %s230, %s231
      %s233 = smul.addr %s232, 8
      %s234 = scalar_lea.vmem %s0, %s233
      %s235 = smul.u32 2, %s20
      %p236 = scmp.lt.s32.totalorder %s19, 1
      %s237 = scalar_select %p236, %s19, 1
      %s238 = smul.addr %s237, 2
      %s239 = smul.addr %s238, 8
      %s240 = scalar_lea.vmem %s3, %s239
      %p241 = scmp.lt.s32.totalorder %s19, 1
      %s242 = scalar_select %p241, %s19, 1
      %s243 = smul.addr %s242, 2
      %s244 = smul.addr %s243, 8
      %s245 = scalar_lea.vmem %s4, %s244
      %p247 = scmp.eq.s32.totalorder %s20, 0
      // Predicated region
      $region37: #{gram_linear_forward.4} parent=35 // pred_check
        %p248 = pneg %p247
      $region38: #{gram_linear_forward.4} parent=35 // pred_check_branch
        %250 = sbr.rel (%p248) target = $region40
      $region39: #{gram_linear_forward.4} parent=35 // pred_region
        %vm251 = vcmask 130048
        %252 = vst.msk [vmem:[%s245] sm:$0xff] %vm251, 0.0
        %253 = vst.msk [vmem:[%s245 + $0x8] sm:$0xff] %vm251, 0.0
      $region40: #{gram_linear_forward.4} parent=35 // pred_fallthru
        _
      %v254 = vld [vmem:[%s234] sm:$0xff]
      %v255 = vld [vmem:[%s234 + $0x8] sm:$0xff]
      %v256 = vld [vmem:[%s234 + $0x10] sm:$0xff]
      %v257 = vld [vmem:[%s234 + $0x18] sm:$0xff]
      %v258 = vld [vmem:[%s234 + $0x20] sm:$0xff]
      %v259 = vld [vmem:[%s234 + $0x28] sm:$0xff]
      %v260 = vld [vmem:[%s234 + $0x30] sm:$0xff]
      %v261 = vld [vmem:[%s234 + $0x38] sm:$0xff]
      %v262 = vpack.c.bf16 %v256, %v254
      %v263 = vpack.c.bf16 %v257, %v255
      %v264 = vpack.c.bf16 %v260, %v258
      %v265 = vpack.c.bf16 %v261, %v259
      %v266 = vld [vmem:[%s1] sm:$0xff]
      %v267 = vld [vmem:[%s1 + $0x8] sm:$0xff]
      %v268 = vld [vmem:[%s1 + $0x10] sm:$0xff]
      %v269 = vld [vmem:[%s1 + $0x18] sm:$0xff]
      %v270 = vpack.c.bf16 %v267, %v266
      %v271 = vpack.c.bf16 %v269, %v268
      %v272 = vld [vmem:[%s2] sm:$0xff]
      %v273 = vld [vmem:[%s2 + $0x8] sm:$0xff]
      %v274 = vld [vmem:[%s2 + $0x10] sm:$0xff]
      %v275 = vld [vmem:[%s2 + $0x18] sm:$0xff]
      %277 = vset.pattern.permute.xlu0 0
      %278 = vperm.xlu0 %277, %v272
      %v279 = vpop.permute.xlu0 %278
      %282 = vset.pattern.permute.xlu0 0
      %283 = vperm.xlu0 %282, %v273
      %v284 = vpop.permute.xlu0 %283
      %287 = vset.pattern.permute.xlu0 0
      %288 = vperm.xlu0 %287, %v274
      %v289 = vpop.permute.xlu0 %288
      %292 = vset.pattern.permute.xlu0 0
      %293 = vperm.xlu0 %292, %v275
      %v294 = vpop.permute.xlu0 %293
      %vm296 = vcmask 261120
      %v298 = vsel %vm296, %v270, 0
      %v301 = vsel %vm296, %v271, 0
      %303 = vmatprep.subr.bf16.mxu0 %v263
      %304 = vmatpush1.bf16.msra.mxu0 %v262
      %305 = vmatprep.subr.bf16.mxu0 %v265
      %306 = vmatpush1.bf16.msra.mxu0 %v264
      %307 = vmatprep.subr.bf16.mxu0 0
      %308 = vmatpush1.bf16.msra.mxu0 0
      %309 = vmatprep.subr.bf16.mxu0 0
      %310 = vmatpush1.bf16.msra.mxu0 0
      %311 = vmatprep.subr.bf16.mxu0 0
      %312 = vmatpush1.bf16.msra.mxu0 0
      %313 = vmatprep.subr.bf16.mxu0 0
      %314 = vmatpush1.bf16.msra.mxu0 0
      %315 = vmatprep.subr.bf16.mxu0 0
      %316 = vmatpush1.bf16.msra.mxu0 0
      %317 = vmatprep.subr.bf16.mxu0 0
      %318 = vmatpush1.bf16.msra.mxu0 0
      %319 = vmatprep.subr.bf16.mxu0 0
      %320 = vmatpush1.bf16.msra.mxu0 0
      %321 = vmatprep.subr.bf16.mxu0 0
      %322 = vmatpush1.bf16.msra.mxu0 0
      %323 = vmatprep.subr.bf16.mxu0 0
      %324 = vmatpush1.bf16.msra.mxu0 0
      %325 = vmatprep.subr.bf16.mxu0 0
      %326 = vmatpush1.bf16.msra.mxu0 0
      %327 = vmatprep.subr.bf16.mxu0 0
      %328 = vmatpush1.bf16.msra.mxu0 0
      %329 = vmatprep.subr.bf16.mxu0 0
      %330 = vmatpush1.bf16.msra.mxu0 0
      %331 = vmatprep.subr.bf16.mxu0 0
      %332 = vmatpush1.bf16.msra.mxu0 0
      %333 = vmatprep.subr.bf16.mxu0 0
      %334 = vmatpush1.bf16.msra.mxu0 0
      %335 = vmatprep.mubr.bf16.mxu0 0
      %336 = vmatmul.mubr.bf16.gmra.mrb[0].mxu0 %v298
      %v337 = vpop.f32.mrb[0].mxu0
      %v338 = vadd.f32 %v279, %v337
      %v339 = vpop.f32.mrb[0].mxu0
      %v340 = vadd.f32 %v279, %v339
      %v341 = vpop.f32.mrb[0].mxu0
      %v342 = vadd.f32 %v284, %v341
      %v343 = vpop.f32.mrb[0].mxu0
      %v344 = vadd.f32 %v284, %v343
      %345 = vmatprep.mubr.bf16.mxu0 0
      %346 = vmatmul.mubr.bf16.gmra.mrb[0].mxu0 %v301
      %v347 = vpop.f32.mrb[0].mxu0
      %v348 = vadd.f32 %v289, %v347
      %v349 = vpop.f32.mrb[0].mxu0
      %v350 = vadd.f32 %v289, %v349
      %v351 = vpop.f32.mrb[0].mxu0
      %v352 = vadd.f32 %v294, %v351
      %v353 = vpop.f32.mrb[0].mxu0
      %v354 = vadd.f32 %v294, %v353
      %355 = vdwg.mxu0
      %v356 = vld [vmem:[%s240] sm:$0xff]
      %v357 = vld [vmem:[%s240 + $0x8] sm:$0xff]
      %v358 = vpack.c.bf16 %v357, %v356
      %v359 = vpack.c.bf16 %v352, %v348
      %v360 = vpack.c.bf16 %v354, %v350
      %vm361 = vcmask 130048
      %v363 = vsel %vm361, %v358, 0
      %365 = vmatprep.subr.bf16.mxu0 %v360
      %366 = vmatpush1.bf16.msra.mxu0 %v359
      %367 = vmatprep.subr.bf16.mxu0 0
      %368 = vmatpush1.bf16.msra.mxu0 0
      %369 = vmatprep.subr.bf16.mxu0 0
      %370 = vmatpush1.bf16.msra.mxu0 0
      %371 = vmatprep.subr.bf16.mxu0 0
      %372 = vmatpush1.bf16.msra.mxu0 0
      %373 = vmatprep.subr.bf16.mxu0 0
      %374 = vmatpush1.bf16.msra.mxu0 0
      %375 = vmatprep.subr.bf16.mxu0 0
      %376 = vmatpush1.bf16.msra.mxu0 0
      %377 = vmatprep.subr.bf16.mxu0 0
      %378 = vmatpush1.bf16.msra.mxu0 0
      %379 = vmatprep.subr.bf16.mxu0 0
      %380 = vmatpush1.bf16.msra.mxu0 0
      %381 = vmatprep.subr.bf16.mxu0 0
      %382 = vmatpush1.bf16.msra.mxu0 0
      %383 = vmatprep.subr.bf16.mxu0 0
      %384 = vmatpush1.bf16.msra.mxu0 0
      %385 = vmatprep.subr.bf16.mxu0 0
      %386 = vmatpush1.bf16.msra.mxu0 0
      %387 = vmatprep.subr.bf16.mxu0 0
      %388 = vmatpush1.bf16.msra.mxu0 0
      %389 = vmatprep.subr.bf16.mxu0 0
      %390 = vmatpush1.bf16.msra.mxu0 0
      %391 = vmatprep.subr.bf16.mxu0 0
      %392 = vmatpush1.bf16.msra.mxu0 0
      %393 = vmatprep.subr.bf16.mxu0 0
      %394 = vmatpush1.bf16.msra.mxu0 0
      %395 = vmatprep.subr.bf16.mxu0 0
      %396 = vmatpush1.bf16.msra.mxu0 0
      %397 = vmatprep.mubr.bf16.mxu0 0
      %398 = vmatmul.mubr.bf16.gmra.mrb[0].mxu0 %v363
      %v399 = vpop.f32.mrb[0].mxu0
      %v400 = vadd.f32 0.0, %v399
      %v401 = vpop.f32.mrb[0].mxu0
      %v402 = vadd.f32 0.0, %v401
      %v403 = vpop.f32.mrb[0].mxu0
      %v404 = vadd.f32 0.0, %v403
      %v405 = vpop.f32.mrb[0].mxu0
      %v406 = vadd.f32 0.0, %v405
      %407 = vdwg.mxu0
      %v408 = vmax.f32 %v400, %v404
      %v409 = vrot.slane %v408, 4
      %v410 = vmax.f32 %v408, %v409
      %v411 = vrot.slane %v410, 2
      %v412 = vmax.f32 %v410, %v411
      %v413 = vrot.slane %v412, 1
      %v414 = vmax.f32 %v412, %v413
      %v415 = vmax.f32 %v402, %v406
      %v416 = vrot.slane %v415, 4
      %v417 = vmax.f32 %v415, %v416
      %v418 = vrot.slane %v417, 2
      %v419 = vmax.f32 %v417, %v418
      %v420 = vrot.slane %v419, 1
      %v421 = vmax.f32 %v419, %v420
      %v422 = vsub.f32 %v400, %v414
      %v423 = vsub.f32 %v402, %v421
      %v424 = vsub.f32 %v404, %v414
      %v425 = vsub.f32 %v406, %v421
      %v426 = vmul.f32 %v422, 1.442695
      %v427 = vpow.pop %v426
      %v428 = vmul.f32 %v423, 1.442695
      %v429 = vpow.pop %v428
      %v430 = vmul.f32 %v424, 1.442695
      %v431 = vpow.pop %v430
      %v432 = vmul.f32 %v425, 1.442695
      %v433 = vpow.pop %v432
      %v434 = vadd.f32 %v427, %v431
      %v435 = vrot.slane %v434, 4
      %v436 = vadd.f32 %v434, %v435
      %v437 = vrot.slane %v436, 2
      %v438 = vadd.f32 %v436, %v437
      %v439 = vrot.slane %v438, 1
      %v440 = vadd.f32 %v438, %v439
      %v441 = vadd.f32 %v429, %v433
      %v442 = vrot.slane %v441, 4
      %v443 = vadd.f32 %v441, %v442
      %v444 = vrot.slane %v443, 2
      %v445 = vadd.f32 %v443, %v444
      %v446 = vrot.slane %v445, 1
      %v447 = vadd.f32 %v445, %v446
      %v448 = vrcp.pop %v440
      %v449 = vrcp.pop %v447
      %v450 = vmul.f32 %v427, %v448
      %v451 = vmul.f32 %v429, %v449
      %v452 = vmul.f32 %v431, %v448
      %v453 = vmul.f32 %v433, %v449
      %v454 = vld [vmem:[%s245] sm:$0xff]
      %v455 = vld [vmem:[%s245 + $0x8] sm:$0xff]
      %v456 = vpack.c.bf16 %v342, %v338
      %v457 = vpack.c.bf16 %v344, %v340
      %v458 = vpack.c.bf16 %v452, %v450
      %v459 = vpack.c.bf16 %v453, %v451
      %460 = vmatprep.subr.bf16.mxu0 %v459
      %461 = vmatpush1.bf16.xpose.msra.mxu0 %v458
      %462 = vmatprep.subr.bf16.mxu0 0
      %463 = vmatpush1.bf16.xpose.msra.mxu0 0
      %464 = vmatprep.subr.bf16.mxu0 0
      %465 = vmatpush1.bf16.xpose.msra.mxu0 0
      %466 = vmatprep.subr.bf16.mxu0 0
      %467 = vmatpush1.bf16.xpose.msra.mxu0 0
      %468 = vmatprep.subr.bf16.mxu0 0
      %469 = vmatpush1.bf16.xpose.msra.mxu0 0
      %470 = vmatprep.subr.bf16.mxu0 0
      %471 = vmatpush1.bf16.xpose.msra.mxu0 0
      %472 = vmatprep.subr.bf16.mxu0 0
      %473 = vmatpush1.bf16.xpose.msra.mxu0 0
      %474 = vmatprep.subr.bf16.mxu0 0
      %475 = vmatpush1.bf16.xpose.msra.mxu0 0
      %476 = vmatprep.subr.bf16.mxu0 0
      %477 = vmatpush1.bf16.xpose.msra.mxu0 0
      %478 = vmatprep.subr.bf16.mxu0 0
      %479 = vmatpush1.bf16.xpose.msra.mxu0 0
      %480 = vmatprep.subr.bf16.mxu0 0
      %481 = vmatpush1.bf16.xpose.msra.mxu0 0
      %482 = vmatprep.subr.bf16.mxu0 0
      %483 = vmatpush1.bf16.xpose.msra.mxu0 0
      %484 = vmatprep.subr.bf16.mxu0 0
      %485 = vmatpush1.bf16.xpose.msra.mxu0 0
      %486 = vmatprep.subr.bf16.mxu0 0
      %487 = vmatpush1.bf16.xpose.msra.mxu0 0
      %488 = vmatprep.subr.bf16.mxu0 0
      %489 = vmatpush1.bf16.xpose.msra.mxu0 0
      %490 = vmatprep.subr.bf16.mxu0 0
      %491 = vmatpush1.bf16.xpose.msra.mxu0 0
      %492 = vmatprep.mubr.bf16.mxu0 %v457
      %493 = vmatmul.mubr.bf16.gmra.mrb[0].mxu0 %v456
      %v494 = vpop.f32.mrb[0].mxu0
      %v495 = vadd.f32 0.0, %v494
      %v496 = vpop.f32.mrb[0].mxu0
      %v497 = vpop.f32.mrb[0].mxu0
      %v498 = vadd.f32 0.0, %v497
      %v499 = vpop.f32.mrb[0].mxu0
      %500 = vdwg.mxu0
      %v501 = vadd.f32 %v454, %v495
      %v502 = vadd.f32 %v455, %v498
      %503 = vst.msk [vmem:[%s245] sm:$0xff] %vm361, %v501
      %504 = vst.msk [vmem:[%s245 + $0x8] sm:$0xff] %vm361, %v502
      %p505 = scmp.lt.s32.totalorder %s19, 1
      %s506 = scalar_select %p505, %s19, 1
      %s507 = smul.addr %s506, 2
      %s508 = smul.addr %s507, 8
      %s509 = scalar_lea.vmem %s4, %s508
      // Predicated region
      $region41: #{gram_linear_forward.4} parent=35 // pred_check
        %p510 = pneg %p141
      $region42: #{gram_linear_forward.4} parent=35 // pred_check_branch
        %512 = sbr.rel (%p510) target = $region44
      $region43: #{gram_linear_forward.4} parent=35 // pred_region
        _
      $region44: #{gram_linear_forward.4} parent=35 // pred_fallthru
        _
    $region36: #{gram_linear_forward.4} parent=5 // pred_fallthru
      _
    %p513 = scmp.le.s32.totalorder 2, %s10
    // Predicated region
    $region45: #{gram_linear_forward.4} parent=5 // pred_check
      %p514 = pneg %p513
    $region46: #{gram_linear_forward.4} parent=5 // pred_check_branch
      %516 = sbr.rel (%p514) target = $region48
    $region47: #{gram_linear_forward.4} parent=5 // pred_region
      %s517 = ssub.s32 %s10, 2
      // Predicated region
      $region49: #{gram_linear_forward.4} parent=47 // pred_check
        %p518 = pneg %p147
      $region50: #{gram_linear_forward.4} parent=47 // pred_check_branch
        %520 = sbr.rel (%p518) target = $region52
      $region51: #{gram_linear_forward.4} parent=47 // pred_region
        %p521 = scmp.lt.s32.totalorder %s21, 1
        %s522 = scalar_select %p521, %s21, 1
        %s523 = smul.addr %s522, 2
        %s524 = smul.addr %s523, 8
        %s525 = scalar_lea.vmem %s4, %s524
      $region52: #{gram_linear_forward.4} parent=47 // pred_fallthru
        _
    $region48: #{gram_linear_forward.4} parent=5 // pred_fallthru
      _
  $region6: #{gram_linear_forward.4} parent=0 // loop_footer
    %s14 = sadd.s32 1, %s10
  $region7: #{gram_linear_forward.4} parent=0 // loop_footer_branch
    %9 = sbr.rel target = $region3
  $region8: #{gram_linear_forward.4} parent=0 // loop_exit
    _

// kernel: gram_linear_forward.5
$region0: #{gram_linear_forward.5}
  #allocation0 [shape = 'u32[]', space=smem, size = 0x4, offset = 0x4, fixed_abs, tag = 'smem constant byte address 0x4 - core index']
  #allocation1 [shape = 'u32[144,128]{1,0:T(1,128)}', space=vmem, size = 0x12000, scoped, tag = 'internal scratch']
  %s0 = inlined_call_operand.vmem [shape: f32[2,32,256], index: 0, kind: input, shape index: {}]
  %s1 = inlined_call_operand.vmem [shape: f32[16,32], index: 1, kind: input, shape index: {}]
  %s2 = inlined_call_operand.vmem [shape: f32[16,1], index: 2, kind: input, shape index: {}]
  %s3 = inlined_call_operand.vmem [shape: f32[2,16,16], index: 3, kind: input, shape index: {}]
  %s4 = inlined_call_operand.vmem [shape: f32[2,32,16], index: 4, kind: input, shape index: {}]
  %s5 = inlined_call_operand.vmem [shape: f32[2,32,256], index: 5, kind: output, shape index: {}]
  %s6 = sld [smem:[#allocation0]]
  $region53: #{gram_linear_forward.5} parent=0
    _
  %s8 = ssub.s32 1, %s6
  %s9 = scalar_select 0, %s8, %s6
  loop: start=0, step=1, limit=4
  $region2: #{gram_linear_forward.5} parent=0 // loop_pre_header
    _
  $region3: #{gram_linear_forward.5} parent=0 // loop_header
    %s11 = sphi 0, %s15
    %p12 = scmp.ge.s32.totalorder %s11, 4
    %s18 = sphi 0, %s30
    %s19 = sphi 0, %s26
    %s20 = sphi 0, %s18
    %s21 = sphi 0, %s19
    %s22 = sphi 0, %s20
    %s23 = sphi 0, %s21
    %s35 = sphi 0, %s37
    %s38 = sphi 0, %s35
    %s39 = sphi 0, %s38
    %s55 = sphi 0, %s39
    %s59 = sphi 0, %s59
    %s61 = sphi 0, %s59
    %s62 = sphi 0, %s61
    %s76 = sphi 0, %s62
    %s80 = sphi 0, %s80
    %s82 = sphi 0, %s80
    %s83 = sphi 0, %s82
    %s97 = sphi 0, %s83
    %s103 = sphi 0, %s105
    %s106 = sphi 0, %s103
    %s107 = sphi 0, %s106
    %s123 = sphi 0, %s107
    %s129 = sphi 0, %s131
    %s132 = sphi 0, %s129
    %s133 = sphi 0, %s132
    %s149 = sphi 0, %s133
    %s157 = sphi 0, %s159
    %s160 = sphi 0, %s157
    %s161 = sphi 0, %s160
    %s177 = sphi 0, %s161
  $region4: #{gram_linear_forward.5} parent=0 // loop_header_branch
    %14 = sbr.rel (%p12) target = $region8
  $region5: #{gram_linear_forward.5} parent=0 // loop_body
    %s16 = ssub.s32 %s11, 1
    %s17 = ssub.s32 %s11, 2
    %s24 = sadd.s32 1, %s19
    %p25 = scmp.ge.s32.totalorder %s24, 1
    %s26 = scalar_select %p25, 0, %s24
    %s27 = sadd.s32 1, %s18
    %s28 = scalar_select %p25, %s27, %s18
    %p29 = scmp.ge.s32.totalorder %s28, 2
    %s30 = scalar_select %p29, 0, %s28
    %s31 = ssub.s32 %s18, %s30
    %s32 = ssub.s32 %s19, %s26
    %s33 = sor.u32 %s31, %s32
    %p34 = scmp.eq.s32.totalorder %s33, 0
    %s36 = sadd.s32 %s35, 1
    %s37 = scalar_select %p34, %s35, %s36
    %p40 = pneg %p34
    %p41 = scmp.eq.s32.totalorder %s11, 1
    %p42 = por %p40, %p41
    %p43 = scmp.ne.s32.totalorder %s35, %s38
    %p44 = scmp.eq.s32.totalorder %s11, 0
    %p45 = por %p43, %p44
    %p46 = scmp.ne.s32.totalorder %s35, %s38
    %p47 = scmp.eq.s32.totalorder %s16, 1
    %p48 = por %p46, %p47
    %p49 = scmp.ne.s32.totalorder %s38, %s39
    %p50 = scmp.eq.s32.totalorder %s16, 0
    %p51 = por %p49, %p50
    %p52 = scmp.ne.s32.totalorder %s38, %s39
    %p53 = scmp.eq.s32.totalorder %s17, 1
    %p54 = por %p52, %p53
    %p56 = scmp.ne.s32.totalorder %s39, %s55
    %p57 = scmp.eq.s32.totalorder %s17, 0
    %p58 = por %p56, %p57
    %s60 = sadd.s32 %s59, 1
    %p63 = scmp.eq.s32.totalorder %s11, 1
    %p64 = scmp.ne.s32.totalorder %s59, %s61
    %p65 = scmp.eq.s32.totalorder %s11, 0
    %p66 = por %p64, %p65
    %p67 = scmp.ne.s32.totalorder %s59, %s61
    %p68 = scmp.eq.s32.totalorder %s16, 1
    %p69 = por %p67, %p68
    %p70 = scmp.ne.s32.totalorder %s61, %s62
    %p71 = scmp.eq.s32.totalorder %s16, 0
    %p72 = por %p70, %p71
    %p73 = scmp.ne.s32.totalorder %s61, %s62
    %p74 = scmp.eq.s32.totalorder %s17, 1
    %p75 = por %p73, %p74
    %p77 = scmp.ne.s32.totalorder %s62, %s76
    %p78 = scmp.eq.s32.totalorder %s17, 0
    %p79 = por %p77, %p78
    %s81 = sadd.s32 %s80, 1
    %p84 = scmp.eq.s32.totalorder %s11, 1
    %p85 = scmp.ne.s32.totalorder %s80, %s82
    %p86 = scmp.eq.s32.totalorder %s11, 0
    %p87 = por %p85, %p86
    %p88 = scmp.ne.s32.totalorder %s80, %s82
    %p89 = scmp.eq.s32.totalorder %s16, 1
    %p90 = por %p88, %p89
    %p91 = scmp.ne.s32.totalorder %s82, %s83
    %p92 = scmp.eq.s32.totalorder %s16, 0
    %p93 = por %p91, %p92
    %p94 = scmp.ne.s32.totalorder %s82, %s83
    %p95 = scmp.eq.s32.totalorder %s17, 1
    %p96 = por %p94, %p95
    %p98 = scmp.ne.s32.totalorder %s83, %s97
    %p99 = scmp.eq.s32.totalorder %s17, 0
    %p100 = por %p98, %p99
    %s101 = ssub.s32 %s18, %s30
    %p102 = scmp.eq.s32.totalorder %s101, 0
    %s104 = sadd.s32 %s103, 1
    %s105 = scalar_select %p102, %s103, %s104
    %p108 = pneg %p102
    %p109 = scmp.eq.s32.totalorder %s11, 1
    %p110 = por %p108, %p109
    %p111 = scmp.ne.s32.totalorder %s103, %s106
    %p112 = scmp.eq.s32.totalorder %s11, 0
    %p113 = por %p111, %p112
    %p114 = scmp.ne.s32.totalorder %s103, %s106
    %p115 = scmp.eq.s32.totalorder %s16, 1
    %p116 = por %p114, %p115
    %p117 = scmp.ne.s32.totalorder %s106, %s107
    %p118 = scmp.eq.s32.totalorder %s16, 0
    %p119 = por %p117, %p118
    %p120 = scmp.ne.s32.totalorder %s106, %s107
    %p121 = scmp.eq.s32.totalorder %s17, 1
    %p122 = por %p120, %p121
    %p124 = scmp.ne.s32.totalorder %s107, %s123
    %p125 = scmp.eq.s32.totalorder %s17, 0
    %p126 = por %p124, %p125
    %s127 = ssub.s32 %s18, %s30
    %p128 = scmp.eq.s32.totalorder %s127, 0
    %s130 = sadd.s32 %s129, 1
    %s131 = scalar_select %p128, %s129, %s130
    %p134 = pneg %p128
    %p135 = scmp.eq.s32.totalorder %s11, 1
    %p136 = por %p134, %p135
    %p137 = scmp.ne.s32.totalorder %s129, %s132
    %p138 = scmp.eq.s32.totalorder %s11, 0
    %p139 = por %p137, %p138
    %p140 = scmp.ne.s32.totalorder %s129, %s132
    %p141 = scmp.eq.s32.totalorder %s16, 1
    %p142 = por %p140, %p141
    %p143 = scmp.ne.s32.totalorder %s132, %s133
    %p144 = scmp.eq.s32.totalorder %s16, 0
    %p145 = por %p143, %p144
    %p146 = scmp.ne.s32.totalorder %s132, %s133
    %p147 = scmp.eq.s32.totalorder %s17, 1
    %p148 = por %p146, %p147
    %p150 = scmp.ne.s32.totalorder %s133, %s149
    %p151 = scmp.eq.s32.totalorder %s17, 0
    %p152 = por %p150, %p151
    %s153 = ssub.s32 %s18, %s30
    %s154 = ssub.s32 %s19, %s26
    %s155 = sor.u32 %s153, %s154
    %p156 = scmp.eq.s32.totalorder %s155, 0
    %s158 = sadd.s32 %s157, 1
    %s159 = scalar_select %p156, %s157, %s158
    %p162 = pneg %p156
    %p163 = scmp.eq.s32.totalorder %s11, 1
    %p164 = por %p162, %p163
    %p165 = scmp.ne.s32.totalorder %s157, %s160
    %p166 = scmp.eq.s32.totalorder %s11, 0
    %p167 = por %p165, %p166
    %p168 = scmp.ne.s32.totalorder %s157, %s160
    %p169 = scmp.eq.s32.totalorder %s16, 1
    %p170 = por %p168, %p169
    %p171 = scmp.ne.s32.totalorder %s160, %s161
    %p172 = scmp.eq.s32.totalorder %s16, 0
    %p173 = por %p171, %p172
    %p174 = scmp.ne.s32.totalorder %s160, %s161
    %p175 = scmp.eq.s32.totalorder %s17, 1
    %p176 = por %p174, %p175
    %p178 = scmp.ne.s32.totalorder %s161, %s177
    %p179 = scmp.eq.s32.totalorder %s17, 0
    %p180 = por %p178, %p179
    %p181 = scmp.le.s32.totalorder 1, %s11
    %p182 = scmp.lt.s32.totalorder %s11, 3
    %p183 = pnand %p181, %p182
    %p184 = pneg %p183
    // Predicated region
    $region9: #{gram_linear_forward.5} parent=5 // pred_check
      _
    $region10: #{gram_linear_forward.5} parent=5 // pred_check_branch
      %186 = sbr.rel (%p183) target = $region12
    $region11: #{gram_linear_forward.5} parent=5 // pred_region
      %s187 = ssub.s32 %s11, 1
      // Predicated region
      $region13: #{gram_linear_forward.5} parent=11 // pred_check
        %p188 = pneg %p72
      $region14: #{gram_linear_forward.5} parent=11 // pred_check_branch
        %190 = sbr.rel (%p188) target = $region16
      $region15: #{gram_linear_forward.5} parent=11 // pred_region
        _
      $region16: #{gram_linear_forward.5} parent=11 // pred_fallthru
        _
      // Predicated region
      $region17: #{gram_linear_forward.5} parent=11 // pred_check
        %p191 = pneg %p93
      $region18: #{gram_linear_forward.5} parent=11 // pred_check_branch
        %193 = sbr.rel (%p191) target = $region20
      $region19: #{gram_linear_forward.5} parent=11 // pred_region
        _
      $region20: #{gram_linear_forward.5} parent=11 // pred_fallthru
        _
    $region12: #{gram_linear_forward.5} parent=5 // pred_fallthru
      _
    %p194 = scmp.lt.s32.totalorder %s11, 2
    // Predicated region
    $region21: #{gram_linear_forward.5} parent=5 // pred_check
      %p195 = pneg %p194
    $region22: #{gram_linear_forward.5} parent=5 // pred_check_branch
      %197 = sbr.rel (%p195) target = $region24
    $region23: #{gram_linear_forward.5} parent=5 // pred_region
      // Predicated region
      $region25: #{gram_linear_forward.5} parent=23 // pred_check
        %p198 = pneg %p45
      $region26: #{gram_linear_forward.5} parent=23 // pred_check_branch
        %200 = sbr.rel (%p198) target = $region28
      $region27: #{gram_linear_forward.5} parent=23 // pred_region
        %s201 = smul.u32 2, %s19
        %p202 = scmp.lt.s32.totalorder %s18, 1
        %s203 = scalar_select %p202, %s18, 1
        %p204 = scmp.lt.s32.totalorder %s201, 1
        %s205 = scalar_select %p204, %s201, 1
        %s206 = smul.addr %s203, 8
        %s207 = sadd.s32 %s205, %s206
        %s208 = smul.addr %s207, 8
        %s209 = scalar_lea.vmem %s0, %s208
        %s210 = smul.u32 2, %s19
      $region28: #{gram_linear_forward.5} parent=23 // pred_fallthru
        _
      // Predicated region
      $region29: #{gram_linear_forward.5} parent=23 // pred_check
        %p211 = pneg %p113
      $region30: #{gram_linear_forward.5} parent=23 // pred_check_branch
        %213 = sbr.rel (%p211) target = $region32
      $region31: #{gram_linear_forward.5} parent=23 // pred_region
        %p214 = scmp.lt.s32.totalorder %s18, 1
        %s215 = scalar_select %p214, %s18, 1
        %s216 = smul.addr %s215, 2
        %s217 = smul.addr %s216, 8
        %s218 = scalar_lea.vmem %s3, %s217
      $region32: #{gram_linear_forward.5} parent=23 // pred_fallthru
        _
      // Predicated region
      $region33: #{gram_linear_forward.5} parent=23 // pred_check
        %p219 = pneg %p139
      $region34: #{gram_linear_forward.5} parent=23 // pred_check_branch
        %221 = sbr.rel (%p219) target = $region36
      $region35: #{gram_linear_forward.5} parent=23 // pred_region
        %p222 = scmp.lt.s32.totalorder %s18, 1
        %s223 = scalar_select %p222, %s18, 1
        %s224 = smul.addr %s223, 4
        %s225 = smul.addr %s224, 8
        %s226 = scalar_lea.vmem %s4, %s225
      $region36: #{gram_linear_forward.5} parent=23 // pred_fallthru
        _
    $region24: #{gram_linear_forward.5} parent=5 // pred_fallthru
      _
    %p227 = scmp.le.s32.totalorder 1, %s11
    %p228 = scmp.lt.s32.totalorder %s11, 3
    %p229 = pnand %p227, %p228
    %p230 = pneg %p229
    // Predicated region
    $region37: #{gram_linear_forward.5} parent=5 // pred_check
      _
    $region38: #{gram_linear_forward.5} parent=5 // pred_check_branch
      %232 = sbr.rel (%p229) target = $region40
    $region39: #{gram_linear_forward.5} parent=5 // pred_region
      %s233 = ssub.s32 %s11, 1
      %s234 = smul.u32 2, %s21
      %p235 = scmp.lt.s32.totalorder %s20, 1
      %s236 = scalar_select %p235, %s20, 1
      %p237 = scmp.lt.s32.totalorder %s234, 1
      %s238 = scalar_select %p237, %s234, 1
      %s239 = smul.addr %s236, 8
      %s240 = sadd.s32 %s238, %s239
      %s241 = smul.addr %s240, 8
      %s242 = scalar_lea.vmem %s0, %s241
      %p243 = pneg %p51
      %p244 = pneg %p48
      %p245 = pneg %p72
      %p246 = pneg %p69
      %p247 = pneg %p93
      %p248 = pneg %p90
      %p249 = scmp.lt.s32.totalorder %s20, 1
      %s250 = scalar_select %p249, %s20, 1
      %s251 = smul.addr %s250, 2
      %s252 = smul.addr %s251, 8
      %s253 = scalar_lea.vmem %s3, %s252
      %p254 = pneg %p119
      %p255 = pneg %p116
      %p256 = scmp.lt.s32.totalorder %s20, 1
      %s257 = scalar_select %p256, %s20, 1
      %s258 = smul.addr %s257, 4
      %s259 = smul.addr %s258, 8
      %s260 = scalar_lea.vmem %s4, %s259
      %p261 = pneg %p145
      %p262 = pneg %p142
      %p263 = pneg %p173
      %p264 = pneg %p170
      %s265 = smul.u32 2, %s21
      %p266 = scmp.lt.s32.totalorder %s20, 1
      %s267 = scalar_select %p266, %s20, 1
      %p268 = scmp.lt.s32.totalorder %s265, 1
      %s269 = scalar_select %p268, %s265, 1
      %s270 = smul.addr %s267, 8
      %s271 = sadd.s32 %s269, %s270
      %s272 = smul.addr %s271, 8
      %s273 = scalar_lea.vmem %s5, %s272
      %s274 = smul.u32 2, %s21
      %p275 = scmp.lt.s32.totalorder %s20, 1
      %s276 = scalar_select %p275, %s20, 1
      %p277 = scmp.lt.s32.totalorder %s274, 1
      %s278 = scalar_select %p277, %s274, 1
      %s279 = smul.addr %s276, 8
      %s280 = sadd.s32 %s278, %s279
      %s281 = smul.addr %s280, 8
      %s282 = scalar_lea.vmem %s0, %s281
      %s283 = smul.u32 2, %s21
      %p284 = scmp.lt.s32.totalorder %s20, 1
      %s285 = scalar_select %p284, %s20, 1
      %s286 = smul.addr %s285, 2
      %s287 = smul.addr %s286, 8
      %s288 = scalar_lea.vmem %s3, %s287
      %p289 = scmp.lt.s32.totalorder %s20, 1
      %s290 = scalar_select %p289, %s20, 1
      %s291 = smul.addr %s290, 4
      %s292 = smul.addr %s291, 8
      %s293 = scalar_lea.vmem %s4, %s292
      %s294 = smul.u32 2, %s21
      %p295 = scmp.lt.s32.totalorder %s20, 1
      %s296 = scalar_select %p295, %s20, 1
      %p297 = scmp.lt.s32.totalorder %s294, 1
      %s298 = scalar_select %p297, %s294, 1
      %s299 = smul.addr %s296, 8
      %s300 = sadd.s32 %s298, %s299
      %s301 = smul.addr %s300, 8
      %s302 = scalar_lea.vmem %s5, %s301
      %s303 = smul.u32 2, %s21
      %v305 = vld [vmem:[%s282] sm:$0xff]
      %v306 = vld [vmem:[%s282 + $0x8] sm:$0xff]
      %v307 = vld [vmem:[%s282 + $0x10] sm:$0xff]
      %v308 = vld [vmem:[%s282 + $0x18] sm:$0xff]
      %v309 = vld [vmem:[%s282 + $0x20] sm:$0xff]
      %v310 = vld [vmem:[%s282 + $0x28] sm:$0xff]
      %v311 = vld [vmem:[%s282 + $0x30] sm:$0xff]
      %v312 = vld [vmem:[%s282 + $0x38] sm:$0xff]
      %v313 = vpack.c.bf16 %v307, %v305
      %v314 = vpack.c.bf16 %v308, %v306
      %v315 = vpack.c.bf16 %v311, %v309
      %v316 = vpack.c.bf16 %v312, %v310
      %v317 = vld [vmem:[%s1] sm:$0xff]
      %v318 = vld [vmem:[%s1 + $0x8] sm:$0xff]
      %v319 = vpack.c.bf16 %v318, %v317
      %v320 = vld [vmem:[%s2] sm:$0xff]
      %v321 = vld [vmem:[%s2 + $0x8] sm:$0xff]
      %323 = vset.pattern.permute.xlu0 0
      %324 = vperm.xlu0 %323, %v320
      %v325 = vpop.permute.xlu0 %324
      %328 = vset.pattern.permute.xlu0 0
      %329 = vperm.xlu0 %328, %v321
      %v330 = vpop.permute.xlu0 %329
      %vm332 = vcmask 261120
      %v334 = vsel %vm332, %v319, 0
      %336 = vmatprep.subr.bf16.mxu0 %v314
      %337 = vmatpush1.bf16.msra.mxu0 %v313
      %338 = vmatprep.subr.bf16.mxu0 %v316
      %339 = vmatpush1.bf16.msra.mxu0 %v315
      %340 = vmatprep.subr.bf16.mxu0 0
      %341 = vmatpush1.bf16.msra.mxu0 0
      %342 = vmatprep.subr.bf16.mxu0 0
      %343 = vmatpush1.bf16.msra.mxu0 0
      %344 = vmatprep.subr.bf16.mxu0 0
      %345 = vmatpush1.bf16.msra.mxu0 0
      %346 = vmatprep.subr.bf16.mxu0 0
      %347 = vmatpush1.bf16.msra.mxu0 0
      %348 = vmatprep.subr.bf16.mxu0 0
      %349 = vmatpush1.bf16.msra.mxu0 0
      %350 = vmatprep.subr.bf16.mxu0 0
      %351 = vmatpush1.bf16.msra.mxu0 0
      %352 = vmatprep.subr.bf16.mxu0 0
      %353 = vmatpush1.bf16.msra.mxu0 0
      %354 = vmatprep.subr.bf16.mxu0 0
      %355 = vmatpush1.bf16.msra.mxu0 0
      %356 = vmatprep.subr.bf16.mxu0 0
      %357 = vmatpush1.bf16.msra.mxu0 0
      %358 = vmatprep.subr.bf16.mxu0 0
      %359 = vmatpush1.bf16.msra.mxu0 0
      %360 = vmatprep.subr.bf16.mxu0 0
      %361 = vmatpush1.bf16.msra.mxu0 0
      %362 = vmatprep.subr.bf16.mxu0 0
      %363 = vmatpush1.bf16.msra.mxu0 0
      %364 = vmatprep.subr.bf16.mxu0 0
      %365 = vmatpush1.bf16.msra.mxu0 0
      %366 = vmatprep.subr.bf16.mxu0 0
      %367 = vmatpush1.bf16.msra.mxu0 0
      %368 = vmatprep.mubr.bf16.mxu0 0
      %369 = vmatmul.mubr.bf16.gmra.mrb[0].mxu0 %v334
      %v370 = vpop.f32.mrb[0].mxu0
      %v371 = vadd.f32 %v325, %v370
      %v372 = vpop.f32.mrb[0].mxu0
      %v373 = vadd.f32 %v325, %v372
      %v374 = vpop.f32.mrb[0].mxu0
      %v375 = vadd.f32 %v330, %v374
      %v376 = vpop.f32.mrb[0].mxu0
      %v377 = vadd.f32 %v330, %v376
      %378 = vdwg.mxu0
      %v379 = vld [vmem:[%s288] sm:$0xff]
      %v380 = vld [vmem:[%s288 + $0x8] sm:$0xff]
      %v381 = vpack.c.bf16 %v380, %v379
      %v382 = vpack.c.bf16 %v375, %v371
      %v383 = vpack.c.bf16 %v377, %v373
      %vm384 = vcmask 130048
      %v386 = vsel %vm384, %v381, 0
      %388 = vmatprep.subr.bf16.mxu0 %v383
      %389 = vmatpush1.bf16.msra.mxu0 %v382
      %390 = vmatprep.subr.bf16.mxu0 0
      %391 = vmatpush1.bf16.msra.mxu0 0
      %392 = vmatprep.subr.bf16.mxu0 0
      %393 = vmatpush1.bf16.msra.mxu0 0
      %394 = vmatprep.subr.bf16.mxu0 0
      %395 = vmatpush1.bf16.msra.mxu0 0
      %396 = vmatprep.subr.bf16.mxu0 0
      %397 = vmatpush1.bf16.msra.mxu0 0
      %398 = vmatprep.subr.bf16.mxu0 0
      %399 = vmatpush1.bf16.msra.mxu0 0
      %400 = vmatprep.subr.bf16.mxu0 0
      %401 = vmatpush1.bf16.msra.mxu0 0
      %402 = vmatprep.subr.bf16.mxu0 0
      %403 = vmatpush1.bf16.msra.mxu0 0
      %404 = vmatprep.subr.bf16.mxu0 0
      %405 = vmatpush1.bf16.msra.mxu0 0
      %406 = vmatprep.subr.bf16.mxu0 0
      %407 = vmatpush1.bf16.msra.mxu0 0
      %408 = vmatprep.subr.bf16.mxu0 0
      %409 = vmatpush1.bf16.msra.mxu0 0
      %410 = vmatprep.subr.bf16.mxu0 0
      %411 = vmatpush1.bf16.msra.mxu0 0
      %412 = vmatprep.subr.bf16.mxu0 0
      %413 = vmatpush1.bf16.msra.mxu0 0
      %414 = vmatprep.subr.bf16.mxu0 0
      %415 = vmatpush1.bf16.msra.mxu0 0
      %416 = vmatprep.subr.bf16.mxu0 0
      %417 = vmatpush1.bf16.msra.mxu0 0
      %418 = vmatprep.subr.bf16.mxu0 0
      %419 = vmatpush1.bf16.msra.mxu0 0
      %420 = vmatprep.mubr.bf16.mxu0 0
      %421 = vmatmul.mubr.bf16.gmra.mrb[0].mxu0 %v386
      %v422 = vpop.f32.mrb[0].mxu0
      %v423 = vadd.f32 0.0, %v422
      %v424 = vpop.f32.mrb[0].mxu0
      %v425 = vadd.f32 0.0, %v424
      %v426 = vpop.f32.mrb[0].mxu0
      %v427 = vadd.f32 0.0, %v426
      %v428 = vpop.f32.mrb[0].mxu0
      %v429 = vadd.f32 0.0, %v428
      %430 = vdwg.mxu0
      %v431 = vmax.f32 %v423, %v427
      %v432 = vrot.slane %v431, 4
      %v433 = vmax.f32 %v431, %v432
      %v434 = vrot.slane %v433, 2
      %v435 = vmax.f32 %v433, %v434
      %v436 = vrot.slane %v435, 1
      %v437 = vmax.f32 %v435, %v436
      %v438 = vmax.f32 %v425, %v429
      %v439 = vrot.slane %v438, 4
      %v440 = vmax.f32 %v438, %v439
      %v441 = vrot.slane %v440, 2
      %v442 = vmax.f32 %v440, %v441
      %v443 = vrot.slane %v442, 1
      %v444 = vmax.f32 %v442, %v443
      %v445 = vsub.f32 %v423, %v437
      %v446 = vsub.f32 %v425, %v444
      %v447 = vsub.f32 %v427, %v437
      %v448 = vsub.f32 %v429, %v444
      %v449 = vmul.f32 %v445, 1.442695
      %v450 = vpow.pop %v449
      %v451 = vmul.f32 %v446, 1.442695
      %v452 = vpow.pop %v451
      %v453 = vmul.f32 %v447, 1.442695
      %v454 = vpow.pop %v453
      %v455 = vmul.f32 %v448, 1.442695
      %v456 = vpow.pop %v455
      %v457 = vadd.f32 %v450, %v454
      %v458 = vrot.slane %v457, 4
      %v459 = vadd.f32 %v457, %v458
      %v460 = vrot.slane %v459, 2
      %v461 = vadd.f32 %v459, %v460
      %v462 = vrot.slane %v461, 1
      %v463 = vadd.f32 %v461, %v462
      %v464 = vadd.f32 %v452, %v456
      %v465 = vrot.slane %v464, 4
      %v466 = vadd.f32 %v464, %v465
      %v467 = vrot.slane %v466, 2
      %v468 = vadd.f32 %v466, %v467
      %v469 = vrot.slane %v468, 1
      %v470 = vadd.f32 %v468, %v469
      %v471 = vrcp.pop %v463
      %v472 = vrcp.pop %v470
      %v473 = vmul.f32 %v450, %v471
      %v474 = vmul.f32 %v452, %v472
      %v475 = vmul.f32 %v454, %v471
      %v476 = vmul.f32 %v456, %v472
      %v477 = vld [vmem:[%s293] sm:$0xff]
      %v478 = vld [vmem:[%s293 + $0x8] sm:$0xff]
      %v479 = vld [vmem:[%s293 + $0x10] sm:$0xff]
      %v480 = vld [vmem:[%s293 + $0x18] sm:$0xff]
      %v481 = vpack.c.bf16 %v478, %v477
      %v482 = vpack.c.bf16 %v480, %v479
      %v483 = vpack.c.bf16 %v475, %v473
      %v484 = vpack.c.bf16 %v476, %v474
      %v486 = vsel %vm384, %v481, 0
      %v489 = vsel %vm384, %v482, 0
      %491 = vmatprep.subr.bf16.mxu0 %v484
      %492 = vmatpush1.bf16.msra.mxu0 %v483
      %493 = vmatprep.subr.bf16.mxu0 0
      %494 = vmatpush1.bf16.msra.mxu0 0
      %495 = vmatprep.subr.bf16.mxu0 0
      %496 = vmatpush1.bf16.msra.mxu0 0
      %497 = vmatprep.subr.bf16.mxu0 0
      %498 = vmatpush1.bf16.msra.mxu0 0
      %499 = vmatprep.subr.bf16.mxu0 0
      %500 = vmatpush1.bf16.msra.mxu0 0
      %501 = vmatprep.subr.bf16.mxu0 0
      %502 = vmatpush1.bf16.msra.mxu0 0
      %503 = vmatprep.subr.bf16.mxu0 0
      %504 = vmatpush1.bf16.msra.mxu0 0
      %505 = vmatprep.subr.bf16.mxu0 0
      %506 = vmatpush1.bf16.msra.mxu0 0
      %507 = vmatprep.subr.bf16.mxu0 0
      %508 = vmatpush1.bf16.msra.mxu0 0
      %509 = vmatprep.subr.bf16.mxu0 0
      %510 = vmatpush1.bf16.msra.mxu0 0
      %511 = vmatprep.subr.bf16.mxu0 0
      %512 = vmatpush1.bf16.msra.mxu0 0
      %513 = vmatprep.subr.bf16.mxu0 0
      %514 = vmatpush1.bf16.msra.mxu0 0
      %515 = vmatprep.subr.bf16.mxu0 0
      %516 = vmatpush1.bf16.msra.mxu0 0
      %517 = vmatprep.subr.bf16.mxu0 0
      %518 = vmatpush1.bf16.msra.mxu0 0
      %519 = vmatprep.subr.bf16.mxu0 0
      %520 = vmatpush1.bf16.msra.mxu0 0
      %521 = vmatprep.subr.bf16.mxu0 0
      %522 = vmatpush1.bf16.msra.mxu0 0
      %523 = vmatprep.mubr.bf16.mxu0 0
      %524 = vmatmul.mubr.bf16.gmra.mrb[0].mxu0 %v486
      %v525 = vpop.f32.mrb[0].mxu0
      %v526 = vadd.f32 0.0, %v525
      %v527 = vpop.f32.mrb[0].mxu0
      %v528 = vadd.f32 0.0, %v527
      %v529 = vpop.f32.mrb[0].mxu0
      %v530 = vadd.f32 0.0, %v529
      %v531 = vpop.f32.mrb[0].mxu0
      %v532 = vadd.f32 0.0, %v531
      %533 = vmatprep.mubr.bf16.mxu0 0
      %534 = vmatmul.mubr.bf16.gmra.mrb[0].mxu0 %v489
      %v535 = vpop.f32.mrb[0].mxu0
      %v536 = vadd.f32 0.0, %v535
      %v537 = vpop.f32.mrb[0].mxu0
      %v538 = vadd.f32 0.0, %v537
      %v539 = vpop.f32.mrb[0].mxu0
      %v540 = vadd.f32 0.0, %v539
      %v541 = vpop.f32.mrb[0].mxu0
      %v542 = vadd.f32 0.0, %v541
      %543 = vdwg.mxu0
      %v544 = vadd.f32 %v305, %v526
      %v545 = vadd.f32 %v306, %v528
      %v546 = vadd.f32 %v307, %v530
      %v547 = vadd.f32 %v308, %v532
      %v548 = vadd.f32 %v309, %v536
      %v549 = vadd.f32 %v310, %v538
      %v550 = vadd.f32 %v311, %v540
      %v551 = vadd.f32 %v312, %v542
      %552 = vst [vmem:[%s302] sm:$0xff] %v544
      %553 = vst [vmem:[%s302 + $0x8] sm:$0xff] %v545
      %554 = vst [vmem:[%s302 + $0x10] sm:$0xff] %v546
      %555 = vst [vmem:[%s302 + $0x18] sm:$0xff] %v547
      %556 = vst [vmem:[%s302 + $0x20] sm:$0xff] %v548
      %557 = vst [vmem:[%s302 + $0x28] sm:$0xff] %v549
      %558 = vst [vmem:[%s302 + $0x30] sm:$0xff] %v550
      %559 = vst [vmem:[%s302 + $0x38] sm:$0xff] %v551
      %s560 = smul.u32 2, %s21
      %p561 = scmp.lt.s32.totalorder %s20, 1
      %s562 = scalar_select %p561, %s20, 1
      %p563 = scmp.lt.s32.totalorder %s560, 1
      %s564 = scalar_select %p563, %s560, 1
      %s565 = smul.addr %s562, 8
      %s566 = sadd.s32 %s564, %s565
      %s567 = smul.addr %s566, 8
      %s568 = scalar_lea.vmem %s5, %s567
      // Predicated region
      $region41: #{gram_linear_forward.5} parent=39 // pred_check
        %p569 = pneg %p170
      $region42: #{gram_linear_forward.5} parent=39 // pred_check_branch
        %571 = sbr.rel (%p569) target = $region44
      $region43: #{gram_linear_forward.5} parent=39 // pred_region
        %s572 = smul.u32 2, %s21
      $region44: #{gram_linear_forward.5} parent=39 // pred_fallthru
        _
    $region40: #{gram_linear_forward.5} parent=5 // pred_fallthru
      _
    %p573 = scmp.le.s32.totalorder 2, %s11
    // Predicated region
    $region45: #{gram_linear_forward.5} parent=5 // pred_check
      %p574 = pneg %p573
    $region46: #{gram_linear_forward.5} parent=5 // pred_check_branch
      %576 = sbr.rel (%p574) target = $region48
    $region47: #{gram_linear_forward.5} parent=5 // pred_region
      %s577 = ssub.s32 %s11, 2
      // Predicated region
      $region49: #{gram_linear_forward.5} parent=47 // pred_check
        %p578 = pneg %p176
      $region50: #{gram_linear_forward.5} parent=47 // pred_check_branch
        %580 = sbr.rel (%p578) target = $region52
      $region51: #{gram_linear_forward.5} parent=47 // pred_region
        %s581 = smul.u32 2, %s23
        %p582 = scmp.lt.s32.totalorder %s22, 1
        %s583 = scalar_select %p582, %s22, 1
        %p584 = scmp.lt.s32.totalorder %s581, 1
        %s585 = scalar_select %p584, %s581, 1
        %s586 = smul.addr %s583, 8
        %s587 = sadd.s32 %s585, %s586
        %s588 = smul.addr %s587, 8
        %s589 = scalar_lea.vmem %s5, %s588
      $region52: #{gram_linear_forward.5} parent=47 // pred_fallthru
        _
    $region48: #{gram_linear_forward.5} parent=5 // pred_fallthru
      _
  $region6: #{gram_linear_forward.5} parent=0 // loop_footer
    %s15 = sadd.s32 1, %s11
  $region7: #{gram_linear_forward.5} parent=0 // loop_footer_branch
    %10 = sbr.rel target = $region3
  $region8: #{gram_linear_forward.5} parent=0 // loop_exit
    _

// kernel: gram_linear_forward.3
$region0: #{gram_linear_forward.3}
  #allocation0 [shape = 'u32[]', space=smem, size = 0x4, offset = 0x4, fixed_abs, tag = 'smem constant byte address 0x4 - core index']
  #allocation1 [shape = 'u32[144,128]{1,0:T(1,128)}', space=vmem, size = 0x12000, scoped, tag = 'internal scratch']
  %s0 = inlined_call_operand.vmem [shape: f32[2,32,256], index: 0, kind: input, shape index: {}]
  %s1 = inlined_call_operand.vmem [shape: f32[2,1,256], index: 1, kind: input, shape index: {}]
  %s2 = inlined_call_operand.vmem [shape: f32[16,32], index: 2, kind: input, shape index: {}]
  %s3 = inlined_call_operand.vmem [shape: f32[16,1], index: 3, kind: input, shape index: {}]
  %s4 = inlined_call_operand.vmem [shape: f32[16,256], index: 4, kind: input, shape index: {}]
  %s5 = inlined_call_operand.vmem [shape: f32[2,16,16], index: 5, kind: output, shape index: {}]
  %s6 = sld [smem:[#allocation0]]
  $region57: #{gram_linear_forward.3} parent=0
    _
  %s8 = ssub.s32 1, %s6
  %s9 = scalar_select 0, %s8, %s6
  loop: start=0, step=1, limit=4
  $region2: #{gram_linear_forward.3} parent=0 // loop_pre_header
    _
  $region3: #{gram_linear_forward.3} parent=0 // loop_header
    %s11 = sphi 0, %s15
    %p12 = scmp.ge.s32.totalorder %s11, 4
    %s18 = sphi 0, %s30
    %s19 = sphi 0, %s26
    %s20 = sphi 0, %s18
    %s21 = sphi 0, %s19
    %s22 = sphi 0, %s20
    %s23 = sphi 0, %s21
    %s35 = sphi 0, %s37
    %s38 = sphi 0, %s35
    %s39 = sphi 0, %s38
    %s55 = sphi 0, %s39
    %s63 = sphi 0, %s65
    %s66 = sphi 0, %s63
    %s67 = sphi 0, %s66
    %s83 = sphi 0, %s67
    %s87 = sphi 0, %s87
    %s89 = sphi 0, %s87
    %s90 = sphi 0, %s89
    %s104 = sphi 0, %s90
    %s108 = sphi 0, %s108
    %s110 = sphi 0, %s108
    %s111 = sphi 0, %s110
    %s125 = sphi 0, %s111
    %s129 = sphi 0, %s129
    %s131 = sphi 0, %s129
    %s132 = sphi 0, %s131
    %s146 = sphi 0, %s132
    %s152 = sphi 0, %s154
    %s155 = sphi 0, %s152
    %s156 = sphi 0, %s155
    %s172 = sphi 0, %s156
  $region4: #{gram_linear_forward.3} parent=0 // loop_header_branch
    %14 = sbr.rel (%p12) target = $region8
  $region5: #{gram_linear_forward.3} parent=0 // loop_body
    %s16 = ssub.s32 %s11, 1
    %s17 = ssub.s32 %s11, 2
    %s24 = sadd.s32 1, %s19
    %p25 = scmp.ge.s32.totalorder %s24, 1
    %s26 = scalar_select %p25, 0, %s24
    %s27 = sadd.s32 1, %s18
    %s28 = scalar_select %p25, %s27, %s18
    %p29 = scmp.ge.s32.totalorder %s28, 2
    %s30 = scalar_select %p29, 0, %s28
    %s31 = ssub.s32 %s18, %s30
    %s32 = ssub.s32 %s19, %s26
    %s33 = sor.u32 %s31, %s32
    %p34 = scmp.eq.s32.totalorder %s33, 0
    %s36 = sadd.s32 %s35, 1
    %s37 = scalar_select %p34, %s35, %s36
    %p40 = pneg %p34
    %p41 = scmp.eq.s32.totalorder %s11, 1
    %p42 = por %p40, %p41
    %p43 = scmp.ne.s32.totalorder %s35, %s38
    %p44 = scmp.eq.s32.totalorder %s11, 0
    %p45 = por %p43, %p44
    %p46 = scmp.ne.s32.totalorder %s35, %s38
    %p47 = scmp.eq.s32.totalorder %s16, 1
    %p48 = por %p46, %p47
    %p49 = scmp.ne.s32.totalorder %s38, %s39
    %p50 = scmp.eq.s32.totalorder %s16, 0
    %p51 = por %p49, %p50
    %p52 = scmp.ne.s32.totalorder %s38, %s39
    %p53 = scmp.eq.s32.totalorder %s17, 1
    %p54 = por %p52, %p53
    %p56 = scmp.ne.s32.totalorder %s39, %s55
    %p57 = scmp.eq.s32.totalorder %s17, 0
    %p58 = por %p56, %p57
    %s59 = ssub.s32 %s18, %s30
    %s60 = ssub.s32 %s19, %s26
    %s61 = sor.u32 %s59, %s60
    %p62 = scmp.eq.s32.totalorder %s61, 0
    %s64 = sadd.s32 %s63, 1
    %s65 = scalar_select %p62, %s63, %s64
    %p68 = pneg %p62
    %p69 = scmp.eq.s32.totalorder %s11, 1
    %p70 = por %p68, %p69
    %p71 = scmp.ne.s32.totalorder %s63, %s66
    %p72 = scmp.eq.s32.totalorder %s11, 0
    %p73 = por %p71, %p72
    %p74 = scmp.ne.s32.totalorder %s63, %s66
    %p75 = scmp.eq.s32.totalorder %s16, 1
    %p76 = por %p74, %p75
    %p77 = scmp.ne.s32.totalorder %s66, %s67
    %p78 = scmp.eq.s32.totalorder %s16, 0
    %p79 = por %p77, %p78
    %p80 = scmp.ne.s32.totalorder %s66, %s67
    %p81 = scmp.eq.s32.totalorder %s17, 1
    %p82 = por %p80, %p81
    %p84 = scmp.ne.s32.totalorder %s67, %s83
    %p85 = scmp.eq.s32.totalorder %s17, 0
    %p86 = por %p84, %p85
    %s88 = sadd.s32 %s87, 1
    %p91 = scmp.eq.s32.totalorder %s11, 1
    %p92 = scmp.ne.s32.totalorder %s87, %s89
    %p93 = scmp.eq.s32.totalorder %s11, 0
    %p94 = por %p92, %p93
    %p95 = scmp.ne.s32.totalorder %s87, %s89
    %p96 = scmp.eq.s32.totalorder %s16, 1
    %p97 = por %p95, %p96
    %p98 = scmp.ne.s32.totalorder %s89, %s90
    %p99 = scmp.eq.s32.totalorder %s16, 0
    %p100 = por %p98, %p99
    %p101 = scmp.ne.s32.totalorder %s89, %s90
    %p102 = scmp.eq.s32.totalorder %s17, 1
    %p103 = por %p101, %p102
    %p105 = scmp.ne.s32.totalorder %s90, %s104
    %p106 = scmp.eq.s32.totalorder %s17, 0
    %p107 = por %p105, %p106
    %s109 = sadd.s32 %s108, 1
    %p112 = scmp.eq.s32.totalorder %s11, 1
    %p113 = scmp.ne.s32.totalorder %s108, %s110
    %p114 = scmp.eq.s32.totalorder %s11, 0
    %p115 = por %p113, %p114
    %p116 = scmp.ne.s32.totalorder %s108, %s110
    %p117 = scmp.eq.s32.totalorder %s16, 1
    %p118 = por %p116, %p117
    %p119 = scmp.ne.s32.totalorder %s110, %s111
    %p120 = scmp.eq.s32.totalorder %s16, 0
    %p121 = por %p119, %p120
    %p122 = scmp.ne.s32.totalorder %s110, %s111
    %p123 = scmp.eq.s32.totalorder %s17, 1
    %p124 = por %p122, %p123
    %p126 = scmp.ne.s32.totalorder %s111, %s125
    %p127 = scmp.eq.s32.totalorder %s17, 0
    %p128 = por %p126, %p127
    %s130 = sadd.s32 %s129, 1
    %p133 = scmp.eq.s32.totalorder %s11, 1
    %p134 = scmp.ne.s32.totalorder %s129, %s131
    %p135 = scmp.eq.s32.totalorder %s11, 0
    %p136 = por %p134, %p135
    %p137 = scmp.ne.s32.totalorder %s129, %s131
    %p138 = scmp.eq.s32.totalorder %s16, 1
    %p139 = por %p137, %p138
    %p140 = scmp.ne.s32.totalorder %s131, %s132
    %p141 = scmp.eq.s32.totalorder %s16, 0
    %p142 = por %p140, %p141
    %p143 = scmp.ne.s32.totalorder %s131, %s132
    %p144 = scmp.eq.s32.totalorder %s17, 1
    %p145 = por %p143, %p144
    %p147 = scmp.ne.s32.totalorder %s132, %s146
    %p148 = scmp.eq.s32.totalorder %s17, 0
    %p149 = por %p147, %p148
    %s150 = ssub.s32 %s18, %s30
    %p151 = scmp.eq.s32.totalorder %s150, 0
    %s153 = sadd.s32 %s152, 1
    %s154 = scalar_select %p151, %s152, %s153
    %p157 = pneg %p151
    %p158 = scmp.eq.s32.totalorder %s11, 1
    %p159 = por %p157, %p158
    %p160 = scmp.ne.s32.totalorder %s152, %s155
    %p161 = scmp.eq.s32.totalorder %s11, 0
    %p162 = por %p160, %p161
    %p163 = scmp.ne.s32.totalorder %s152, %s155
    %p164 = scmp.eq.s32.totalorder %s16, 1
    %p165 = por %p163, %p164
    %p166 = scmp.ne.s32.totalorder %s155, %s156
    %p167 = scmp.eq.s32.totalorder %s16, 0
    %p168 = por %p166, %p167
    %p169 = scmp.ne.s32.totalorder %s155, %s156
    %p170 = scmp.eq.s32.totalorder %s17, 1
    %p171 = por %p169, %p170
    %p173 = scmp.ne.s32.totalorder %s156, %s172
    %p174 = scmp.eq.s32.totalorder %s17, 0
    %p175 = por %p173, %p174
    %p176 = scmp.le.s32.totalorder 1, %s11
    %p177 = scmp.lt.s32.totalorder %s11, 3
    %p178 = pnand %p176, %p177
    %p179 = pneg %p178
    // Predicated region
    $region9: #{gram_linear_forward.3} parent=5 // pred_check
      _
    $region10: #{gram_linear_forward.3} parent=5 // pred_check_branch
      %181 = sbr.rel (%p178) target = $region12
    $region11: #{gram_linear_forward.3} parent=5 // pred_region
      %s182 = ssub.s32 %s11, 1
      // Predicated region
      $region13: #{gram_linear_forward.3} parent=11 // pred_check
        %p183 = pneg %p100
      $region14: #{gram_linear_forward.3} parent=11 // pred_check_branch
        %185 = sbr.rel (%p183) target = $region16
      $region15: #{gram_linear_forward.3} parent=11 // pred_region
        _
      $region16: #{gram_linear_forward.3} parent=11 // pred_fallthru
        _
      // Predicated region
      $region17: #{gram_linear_forward.3} parent=11 // pred_check
        %p186 = pneg %p121
      $region18: #{gram_linear_forward.3} parent=11 // pred_check_branch
        %188 = sbr.rel (%p186) target = $region20
      $region19: #{gram_linear_forward.3} parent=11 // pred_region
        _
      $region20: #{gram_linear_forward.3} parent=11 // pred_fallthru
        _
      // Predicated region
      $region21: #{gram_linear_forward.3} parent=11 // pred_check
        %p189 = pneg %p142
      $region22: #{gram_linear_forward.3} parent=11 // pred_check_branch
        %191 = sbr.rel (%p189) target = $region24
      $region23: #{gram_linear_forward.3} parent=11 // pred_region
        _
      $region24: #{gram_linear_forward.3} parent=11 // pred_fallthru
        _
    $region12: #{gram_linear_forward.3} parent=5 // pred_fallthru
      _
    %p192 = scmp.lt.s32.totalorder %s11, 2
    // Predicated region
    $region25: #{gram_linear_forward.3} parent=5 // pred_check
      %p193 = pneg %p192
    $region26: #{gram_linear_forward.3} parent=5 // pred_check_branch
      %195 = sbr.rel (%p193) target = $region28
    $region27: #{gram_linear_forward.3} parent=5 // pred_region
      // Predicated region
      $region29: #{gram_linear_forward.3} parent=27 // pred_check
        %p196 = pneg %p45
      $region30: #{gram_linear_forward.3} parent=27 // pred_check_branch
        %198 = sbr.rel (%p196) target = $region32
      $region31: #{gram_linear_forward.3} parent=27 // pred_region
        %s199 = smul.u32 2, %s19
        %p200 = scmp.lt.s32.totalorder %s18, 1
        %s201 = scalar_select %p200, %s18, 1
        %p202 = scmp.lt.s32.totalorder %s199, 1
        %s203 = scalar_select %p202, %s199, 1
        %s204 = smul.addr %s201, 8
        %s205 = sadd.s32 %s203, %s204
        %s206 = smul.addr %s205, 8
        %s207 = scalar_lea.vmem %s0, %s206
        %s208 = smul.u32 2, %s19
      $region32: #{gram_linear_forward.3} parent=27 // pred_fallthru
        _
      // Predicated region
      $region33: #{gram_linear_forward.3} parent=27 // pred_check
        %p209 = pneg %p73
      $region34: #{gram_linear_forward.3} parent=27 // pred_check_branch
        %211 = sbr.rel (%p209) target = $region36
      $region35: #{gram_linear_forward.3} parent=27 // pred_region
        %s212 = smul.u32 2, %s19
        %p213 = scmp.lt.s32.totalorder %s18, 1
        %s214 = scalar_select %p213, %s18, 1
        %p215 = scmp.lt.s32.totalorder %s212, 1
        %s216 = scalar_select %p215, %s212, 1
        %s217 = smul.addr %s214, 2
        %s218 = sadd.s32 %s216, %s217
        %s219 = scalar_lea.vmem %s1, %s218
        %s220 = smul.u32 2, %s19
      $region36: #{gram_linear_forward.3} parent=27 // pred_fallthru
        _
    $region28: #{gram_linear_forward.3} parent=5 // pred_fallthru
      _
    %p221 = scmp.le.s32.totalorder 1, %s11
    %p222 = scmp.lt.s32.totalorder %s11, 3
    %p223 = pnand %p221, %p222
    %p224 = pneg %p223
    // Predicated region
    $region37: #{gram_linear_forward.3} parent=5 // pred_check
      _
    $region38: #{gram_linear_forward.3} parent=5 // pred_check_branch
      %226 = sbr.rel (%p223) target = $region40
    $region39: #{gram_linear_forward.3} parent=5 // pred_region
      %s227 = ssub.s32 %s11, 1
      %s228 = smul.u32 2, %s21
      %p229 = scmp.lt.s32.totalorder %s20, 1
      %s230 = scalar_select %p229, %s20, 1
      %p231 = scmp.lt.s32.totalorder %s228, 1
      %s232 = scalar_select %p231, %s228, 1
      %s233 = smul.addr %s230, 8
      %s234 = sadd.s32 %s232, %s233
      %s235 = smul.addr %s234, 8
      %s236 = scalar_lea.vmem %s0, %s235
      %p237 = pneg %p51
      %p238 = pneg %p48
      %s239 = smul.u32 2, %s21
      %p240 = scmp.lt.s32.totalorder %s20, 1
      %s241 = scalar_select %p240, %s20, 1
      %p242 = scmp.lt.s32.totalorder %s239, 1
      %s243 = scalar_select %p242, %s239, 1
      %s244 = smul.addr %s241, 2
      %s245 = sadd.s32 %s243, %s244
      %s246 = scalar_lea.vmem %s1, %s245
      %p247 = pneg %p79
      %p248 = pneg %p76
      %p249 = pneg %p100
      %p250 = pneg %p97
      %p251 = pneg %p121
      %p252 = pneg %p118
      %p253 = pneg %p142
      %p254 = pneg %p139
      %p255 = pneg %p168
      %p256 = pneg %p165
      %p257 = scmp.lt.s32.totalorder %s20, 1
      %s258 = scalar_select %p257, %s20, 1
      %s259 = smul.addr %s258, 2
      %s260 = smul.addr %s259, 8
      %s261 = scalar_lea.vmem %s5, %s260
      %s262 = smul.u32 2, %s21
      %p263 = scmp.lt.s32.totalorder %s20, 1
      %s264 = scalar_select %p263, %s20, 1
      %p265 = scmp.lt.s32.totalorder %s262, 1
      %s266 = scalar_select %p265, %s262, 1
      %s267 = smul.addr %s264, 8
      %s268 = sadd.s32 %s266, %s267
      %s269 = smul.addr %s268, 8
      %s270 = scalar_lea.vmem %s0, %s269
      %s271 = smul.u32 2, %s21
      %s272 = smul.u32 2, %s21
      %p273 = scmp.lt.s32.totalorder %s20, 1
      %s274 = scalar_select %p273, %s20, 1
      %p275 = scmp.lt.s32.totalorder %s272, 1
      %s276 = scalar_select %p275, %s272, 1
      %s277 = smul.addr %s274, 2
      %s278 = sadd.s32 %s276, %s277
      %s279 = scalar_lea.vmem %s1, %s278
      %s280 = smul.u32 2, %s21
      %p281 = scmp.lt.s32.totalorder %s20, 1
      %s282 = scalar_select %p281, %s20, 1
      %s283 = smul.addr %s282, 2
      %s284 = smul.addr %s283, 8
      %s285 = scalar_lea.vmem %s5, %s284
      %p287 = scmp.eq.s32.totalorder %s21, 0
      // Predicated region
      $region41: #{gram_linear_forward.3} parent=39 // pred_check
        %p288 = pneg %p287
      $region42: #{gram_linear_forward.3} parent=39 // pred_check_branch
        %290 = sbr.rel (%p288) target = $region44
      $region43: #{gram_linear_forward.3} parent=39 // pred_region
        %vm291 = vcmask 130048
        %292 = vst.msk [vmem:[%s285] sm:$0xff] %vm291, 0.0
        %293 = vst.msk [vmem:[%s285 + $0x8] sm:$0xff] %vm291, 0.0
      $region44: #{gram_linear_forward.3} parent=39 // pred_fallthru
        _
      %v294 = vld [vmem:[%s270] sm:$0xff]
      %v295 = vld [vmem:[%s270 + $0x8] sm:$0xff]
      %v296 = vld [vmem:[%s270 + $0x10] sm:$0xff]
      %v297 = vld [vmem:[%s270 + $0x18] sm:$0xff]
      %v298 = vld [vmem:[%s270 + $0x20] sm:$0xff]
      %v299 = vld [vmem:[%s270 + $0x28] sm:$0xff]
      %v300 = vld [vmem:[%s270 + $0x30] sm:$0xff]
      %v301 = vld [vmem:[%s270 + $0x38] sm:$0xff]
      %v302 = vpack.c.bf16 %v296, %v294
      %v303 = vpack.c.bf16 %v297, %v295
      %v304 = vpack.c.bf16 %v300, %v298
      %v305 = vpack.c.bf16 %v301, %v299
      %v306 = vld [vmem:[%s279] sm:$0x3]
      %v307 = vld [vmem:[%s2] sm:$0xff]
      %v308 = vld [vmem:[%s2 + $0x8] sm:$0xff]
      %v309 = vpack.c.bf16 %v308, %v307
      %v310 = vld [vmem:[%s3] sm:$0xff]
      %v311 = vld [vmem:[%s3 + $0x8] sm:$0xff]
      %313 = vset.pattern.permute.xlu0 0
      %314 = vperm.xlu0 %313, %v310
      %v315 = vpop.permute.xlu0 %314
      %318 = vset.pattern.permute.xlu0 0
      %319 = vperm.xlu0 %318, %v311
      %v320 = vpop.permute.xlu0 %319
      %vm322 = vcmask 261120
      %v324 = vsel %vm322, %v309, 0
      %326 = vmatprep.subr.bf16.mxu0 %v303
      %327 = vmatpush1.bf16.msra.mxu0 %v302
      %328 = vmatprep.subr.bf16.mxu0 %v305
      %329 = vmatpush1.bf16.msra.mxu0 %v304
      %330 = vmatprep.subr.bf16.mxu0 0
      %331 = vmatpush1.bf16.msra.mxu0 0
      %332 = vmatprep.subr.bf16.mxu0 0
      %333 = vmatpush1.bf16.msra.mxu0 0
      %334 = vmatprep.subr.bf16.mxu0 0
      %335 = vmatpush1.bf16.msra.mxu0 0
      %336 = vmatprep.subr.bf16.mxu0 0
      %337 = vmatpush1.bf16.msra.mxu0 0
      %338 = vmatprep.subr.bf16.mxu0 0
      %339 = vmatpush1.bf16.msra.mxu0 0
      %340 = vmatprep.subr.bf16.mxu0 0
      %341 = vmatpush1.bf16.msra.mxu0 0
      %342 = vmatprep.subr.bf16.mxu0 0
      %343 = vmatpush1.bf16.msra.mxu0 0
      %344 = vmatprep.subr.bf16.mxu0 0
      %345 = vmatpush1.bf16.msra.mxu0 0
      %346 = vmatprep.subr.bf16.mxu0 0
      %347 = vmatpush1.bf16.msra.mxu0 0
      %348 = vmatprep.subr.bf16.mxu0 0
      %349 = vmatpush1.bf16.msra.mxu0 0
      %350 = vmatprep.subr.bf16.mxu0 0
      %351 = vmatpush1.bf16.msra.mxu0 0
      %352 = vmatprep.subr.bf16.mxu0 0
      %353 = vmatpush1.bf16.msra.mxu0 0
      %354 = vmatprep.subr.bf16.mxu0 0
      %355 = vmatpush1.bf16.msra.mxu0 0
      %356 = vmatprep.subr.bf16.mxu0 0
      %357 = vmatpush1.bf16.msra.mxu0 0
      %358 = vmatprep.mubr.bf16.mxu0 0
      %359 = vmatmul.mubr.bf16.gmra.mrb[0].mxu0 %v324
      %v360 = vpop.f32.mrb[0].mxu0
      %v361 = vadd.f32 %v315, %v360
      %v362 = vpop.f32.mrb[0].mxu0
      %v363 = vadd.f32 %v315, %v362
      %v364 = vpop.f32.mrb[0].mxu0
      %v365 = vadd.f32 %v320, %v364
      %v366 = vpop.f32.mrb[0].mxu0
      %v367 = vadd.f32 %v320, %v366
      %368 = vdwg.mxu0
      %v370 = vlaneseq
      %v371 = vshrl.u32 %v370, 7
      %v372 = vsub.s32 0, %v371
      %v373 = vrot.slane %v306, %v372
      %v374 = vlaneseq
      %v375 = vshrl.u32 %v374, 7
      %v376 = vsub.s32 1, %v375
      %v377 = vrot.slane %v306, %v376
      %v380 = vmul.f32 %v361, %v373
      %v381 = vmul.f32 %v363, %v377
      %v382 = vmul.f32 %v365, %v373
      %v383 = vmul.f32 %v367, %v377
      %v384 = vpack.c.bf16 %v382, %v380
      %v385 = vpack.c.bf16 %v383, %v381
      %s386 = smul.u32 %s21, 256
      %s387 = sshra.s32 %s386, 7
      %s388 = sand.u32 %s386, 127
      %s389 = smul.addr %s387, 8
      %s390 = scalar_lea.vmem %s4, %s389
      %v391 = vld [vmem:[%s390] sm:$0xff]
      %v392 = vld [vmem:[%s390 + $0x8] sm:$0xff]
      %v393 = vld [vmem:[%s390 + $0x10] sm:$0xff]
      %v394 = vld [vmem:[%s390 + $0x18] sm:$0xff]
      %v395 = vpack.c.bf16 %v393, %v391
      %v396 = vpack.c.bf16 %v394, %v392
      %v397 = vld [vmem:[%s285] sm:$0xff]
      %v398 = vld [vmem:[%s285 + $0x8] sm:$0xff]
      %399 = vmatprep.subr.bf16.mxu0 %v385
      %400 = vmatpush1.bf16.xpose.msra.mxu0 %v384
      %401 = vmatprep.subr.bf16.mxu0 0
      %402 = vmatpush1.bf16.xpose.msra.mxu0 0
      %403 = vmatprep.subr.bf16.mxu0 0
      %404 = vmatpush1.bf16.xpose.msra.mxu0 0
      %405 = vmatprep.subr.bf16.mxu0 0
      %406 = vmatpush1.bf16.xpose.msra.mxu0 0
      %407 = vmatprep.subr.bf16.mxu0 0
      %408 = vmatpush1.bf16.xpose.msra.mxu0 0
      %409 = vmatprep.subr.bf16.mxu0 0
      %410 = vmatpush1.bf16.xpose.msra.mxu0 0
      %411 = vmatprep.subr.bf16.mxu0 0
      %412 = vmatpush1.bf16.xpose.msra.mxu0 0
      %413 = vmatprep.subr.bf16.mxu0 0
      %414 = vmatpush1.bf16.xpose.msra.mxu0 0
      %415 = vmatprep.subr.bf16.mxu0 0
      %416 = vmatpush1.bf16.xpose.msra.mxu0 0
      %417 = vmatprep.subr.bf16.mxu0 0
      %418 = vmatpush1.bf16.xpose.msra.mxu0 0
      %419 = vmatprep.subr.bf16.mxu0 0
      %420 = vmatpush1.bf16.xpose.msra.mxu0 0
      %421 = vmatprep.subr.bf16.mxu0 0
      %422 = vmatpush1.bf16.xpose.msra.mxu0 0
      %423 = vmatprep.subr.bf16.mxu0 0
      %424 = vmatpush1.bf16.xpose.msra.mxu0 0
      %425 = vmatprep.subr.bf16.mxu0 0
      %426 = vmatpush1.bf16.xpose.msra.mxu0 0
      %427 = vmatprep.subr.bf16.mxu0 0
      %428 = vmatpush1.bf16.xpose.msra.mxu0 0
      %429 = vmatprep.subr.bf16.mxu0 0
      %430 = vmatpush1.bf16.xpose.msra.mxu0 0
      %431 = vmatprep.mubr.bf16.mxu0 %v396
      %432 = vmatmul.mubr.bf16.gmra.mrb[0].mxu0 %v395
      %v433 = vpop.f32.mrb[0].mxu0
      %v434 = vadd.f32 0.0, %v433
      %v435 = vpop.f32.mrb[0].mxu0
      %v436 = vpop.f32.mrb[0].mxu0
      %v437 = vadd.f32 0.0, %v436
      %v438 = vpop.f32.mrb[0].mxu0
      %439 = vdwg.mxu0
      %v440 = vadd.f32 %v397, %v434
      %v441 = vadd.f32 %v398, %v437
      %vm442 = vcmask 130048
      %443 = vst.msk [vmem:[%s285] sm:$0xff] %vm442, %v440
      %444 = vst.msk [vmem:[%s285 + $0x8] sm:$0xff] %vm442, %v441
      %p445 = scmp.lt.s32.totalorder %s20, 1
      %s446 = scalar_select %p445, %s20, 1
      %s447 = smul.addr %s446, 2
      %s448 = smul.addr %s447, 8
      %s449 = scalar_lea.vmem %s5, %s448
      // Predicated region
      $region45: #{gram_linear_forward.3} parent=39 // pred_check
        %p450 = pneg %p165
      $region46: #{gram_linear_forward.3} parent=39 // pred_check_branch
        %452 = sbr.rel (%p450) target = $region48
      $region47: #{gram_linear_forward.3} parent=39 // pred_region
        _
      $region48: #{gram_linear_forward.3} parent=39 // pred_fallthru
        _
    $region40: #{gram_linear_forward.3} parent=5 // pred_fallthru
      _
    %p453 = scmp.le.s32.totalorder 2, %s11
    // Predicated region
    $region49: #{gram_linear_forward.3} parent=5 // pred_check
      %p454 = pneg %p453
    $region50: #{gram_linear_forward.3} parent=5 // pred_check_branch
      %456 = sbr.rel (%p454) target = $region52
    $region51: #{gram_linear_forward.3} parent=5 // pred_region
      %s457 = ssub.s32 %s11, 2
      // Predicated region
      $region53: #{gram_linear_forward.3} parent=51 // pred_check
        %p458 = pneg %p171
      $region54: #{gram_linear_forward.3} parent=51 // pred_check_branch
        %460 = sbr.rel (%p458) target = $region56
      $region55: #{gram_linear_forward.3} parent=51 // pred_region
        %p461 = scmp.lt.s32.totalorder %s22, 1
        %s462 = scalar_select %p461, %s22, 1
        %s463 = smul.addr %s462, 2
        %s464 = smul.addr %s463, 8
        %s465 = scalar_lea.vmem %s5, %s464
      $region56: #{gram_linear_forward.3} parent=51 // pred_fallthru
        _
    $region52: #{gram_linear_forward.3} parent=5 // pred_fallthru
      _
  $region6: #{gram_linear_forward.3} parent=0 // loop_footer
    %s15 = sadd.s32 1, %s11
  $region7: #{gram_linear_forward.3} parent=0 // loop_footer_branch
    %10 = sbr.rel target = $region3
  $region8: #{gram_linear_forward.3} parent=0 // loop_exit
    _

</llo_original>
